<compile_context>
chip_gen: v7x
topology: tpu7x:2x2x1
jax: 0.10.0
libtpu: 0.0.40
codegen_flags: <defaults>
</compile_context>

<pallas_src>
import functools
import math

import jax
import jax.numpy as jnp
from jax.experimental import pallas as pl
from jax.experimental.pallas import tpu as pltpu


def _mha_dot_kernel(q_lens_ref, k_lens_ref,            # scalar prefetch (SMEM)
                    q_ref, k_ref, v_ref,               # inputs  (VMEM tiles)
                    out_ref, *opt_scores,               # outputs (VMEM tiles)
                    heads, d_q, d_k, d_v, q_len, k_len, tq,
                    is_end_padded, mxu_dtype):
    scores_ref = opt_scores[0] if opt_scores else None
    b = pl.program_id(0)
    qi = pl.program_id(1)

    k_valid_len = k_lens_ref[b]
    q_valid_len = q_lens_ref[b]

    # Key-side validity mask: one (1, k_len) row shared by all heads.
    k_pos = jax.lax.broadcasted_iota(jnp.int32, (1, k_len), 1)
    if is_end_padded:
        k_valid = k_pos < k_valid_len
    else:
        k_valid = k_pos >= (k_len - k_valid_len)

    # Query-side validity mask: (tq, 1) column using the global row index.
    q_pos = jax.lax.broadcasted_iota(jnp.int32, (tq, 1), 0) + qi * tq
    if is_end_padded:
        q_valid = q_pos < q_valid_len
    else:
        q_valid = q_pos >= (q_len - q_valid_len)

    scale = jnp.float32(1.0 / math.sqrt(d_q))
    neg_inf = jnp.float32(-1000000000.0)

    for h in range(heads):                       # static unroll over heads
        # Per-head operands sliced directly from the input Refs (static lane
        # slices); fed to the MXU in mxu_dtype with f32 accumulation.
        q_h = q_ref[0, :, h * d_q:(h + 1) * d_q]         # (tq,    d_q)
        k_h = k_ref[0, :, h * d_k:(h + 1) * d_k]         # (k_len, d_k)
        v_h = v_ref[0, :, h * d_v:(h + 1) * d_v]         # (k_len, d_v)

        # Fold 1/sqrt(d_q) into q: tq*d_q multiplies instead of tq*k_len.
        q_h = (q_h.astype(jnp.float32) * scale).astype(mxu_dtype)

        # scores = (q/sqrt(d_q)) @ k^T : contract last dims of both operands,
        # so no transposed copy of K is materialized.
        s = jax.lax.dot_general(q_h, k_h.astype(mxu_dtype),
                                (((1,), (1,)), ((), ())),
                                preferred_element_type=jnp.float32)
        s = jnp.where(k_valid, s, neg_inf)

        # Softmax over the key axis (f32 math; exact reciprocal on the tiny
        # (tq, 1) denominator so att_scores rows sum to 1).
        m = jnp.max(s, axis=-1, keepdims=True)
        e = jnp.exp(s - m)
        denom = jnp.sum(e, axis=-1, keepdims=True)
        p = e * (jnp.float32(1.0) / denom)

        if scores_ref is not None:
            scores_ref[0, h] = p.astype(scores_ref.dtype)

        att_h = jax.lax.dot_general(p.astype(mxu_dtype), v_h.astype(mxu_dtype),
                                    (((1,), (0,)), ((), ())),
                                    preferred_element_type=jnp.float32)
        # Mask invalid query rows and store straight into the lane-dense
        # output slab (bounds the per-head live range; no concatenate).
        att_h = jnp.where(q_valid, att_h, jnp.float32(0.0))
        out_ref[0, :, h * d_v:(h + 1) * d_v] = att_h.astype(out_ref.dtype)


def _vmem_capacity_bytes():
    """Physical VMEM per core if queryable, else a v7x-safe fallback."""
    try:
        info = pltpu.get_tpu_info()
        cap = getattr(info, "vmem_capacity_bytes", None)
        if cap:
            return int(cap)
    except Exception:
        pass
    return 64 * 1024 * 1024


def multi_head_attention(q, k, v, q_sequence_lengths, k_sequence_lengths, *,
                         heads, attention_type='dot', dp=0, is_end_padded=True,
                         emit_att_scores=True, scores_dtype=None,
                         mxu_dtype=None, q_block=None, kv_buffer_count=2,
                         vmem_budget_bytes=None):
    """Pallas implementation of MultiHeadAttention.forward (dot attention).

    q: (bs, q_len, q_ts), k: (bs, k_len, k_ts), v: (bs, k_len, v_ts)
    Returns {'output': (bs, q_len, v_ts), 'att_scores': (bs, heads, q_len, k_len) | None}.
    """
    assert attention_type == 'dot', "only 'dot' attention is implemented"
    assert dp == 0, "dropout not implemented"

    bs, q_len, q_ts = q.shape
    _, k_len, k_ts = k.shape
    _, v_len, v_ts = v.shape
    assert v_len == k_len
    assert q_ts % heads == 0 and k_ts % heads == 0 and v_ts % heads == 0
    assert q_ts == k_ts, "dot attention requires q_ts == k_ts"

    d_q, d_k, d_v = q_ts // heads, k_ts // heads, v_ts // heads

    if mxu_dtype is None:
        # bf16 is the native MXU dtype; f32 accumulation keeps softmax exact-ish.
        mxu_dtype = jnp.bfloat16 if q.dtype == jnp.float32 else q.dtype
    if scores_dtype is None:
        scores_dtype = q.dtype     # module semantics; pass bf16 for perf

    # ---- VMEM budget -> largest legal q tile ------------------------------
    if vmem_budget_bytes is None:
        vmem_budget_bytes = _vmem_capacity_bytes() * 3 // 4

    def _vmem_bytes(tq_):
        by = 2 * tq_ * q_ts * q.dtype.itemsize                       # q (2 bufs)
        by += kv_buffer_count * k_len * k_ts * k.dtype.itemsize      # k
        by += kv_buffer_count * k_len * v_ts * v.dtype.itemsize      # v
        by += 2 * tq_ * v_ts * q.dtype.itemsize                      # output
        if emit_att_scores:
            by += 2 * heads * tq_ * k_len * jnp.dtype(scores_dtype).itemsize
        return by

    cands = sorted({q_len} | {d for d in range(8, q_len + 1, 8) if q_len % d == 0},
                   reverse=True)
    if q_block is not None:
        capped = [c for c in cands if c <= q_block]
        cands = capped or cands
    if bs == 1:
        # v7x has 2 TensorCores: keep at least 2 grid steps to use both.
        split = [c for c in cands if q_len // c >= 2]
        cands = split or cands
    tq = next((c for c in cands if _vmem_bytes(c) <= vmem_budget_bytes), cands[-1])
    n_q = q_len // tq

    q_lens = q_sequence_lengths.astype(jnp.int32)
    k_lens = k_sequence_lengths.astype(jnp.int32)

    kernel = functools.partial(
        _mha_dot_kernel, heads=heads, d_q=d_q, d_k=d_k, d_v=d_v,
        q_len=q_len, k_len=k_len, tq=tq, is_end_padded=is_end_padded,
        mxu_dtype=mxu_dtype)

    kv_kwargs = {}
    if kv_buffer_count != 2:
        # K/V block index is constant across the qi axis; fewer buffers
        # reclaims VMEM for a larger tq (matters most under v7x's 64 MiB).
        kv_kwargs = dict(pipeline_mode=pl.Buffered(kv_buffer_count))

    in_specs = [
        # Original HBM layouts, lane-dense last dims (heads*d): no wrapper
        # reshape/transpose copies.
        pl.BlockSpec((1, tq, q_ts), lambda b, qi, ql, kl: (b, qi, 0)),
        pl.BlockSpec((1, k_len, k_ts), lambda b, qi, ql, kl: (b, 0, 0), **kv_kwargs),
        pl.BlockSpec((1, k_len, v_ts), lambda b, qi, ql, kl: (b, 0, 0), **kv_kwargs),
    ]

    out_spec_o = pl.BlockSpec((1, tq, v_ts), lambda b, qi, ql, kl: (b, qi, 0))
    out_shape_o = jax.ShapeDtypeStruct((bs, q_len, v_ts), q.dtype)
    if emit_att_scores:
        out_specs = [out_spec_o,
                     pl.BlockSpec((1, heads, tq, k_len),
                                  lambda b, qi, ql, kl: (b, 0, qi, 0))]
        out_shape = (out_shape_o,
                     jax.ShapeDtypeStruct((bs, heads, q_len, k_len), scores_dtype))
    else:
        out_specs = out_spec_o
        out_shape = out_shape_o

    flops = 2 * bs * heads * q_len * k_len * (d_q + d_v)
    bytes_accessed = (q.size * q.dtype.itemsize + k.size * k.dtype.itemsize
                      + v.size * v.dtype.itemsize
                      + bs * q_len * v_ts * q.dtype.itemsize)
    if emit_att_scores:
        bytes_accessed += bs * heads * q_len * k_len * jnp.dtype(scores_dtype).itemsize
    cost = pl.CostEstimate(flops=flops,
                           transcendentals=bs * heads * q_len * k_len,
                           bytes_accessed=bytes_accessed)

    grid_spec = pltpu.PrefetchScalarGridSpec(
        num_scalar_prefetch=2,
        grid=(bs, n_q),
        in_specs=in_specs,
        out_specs=out_specs,
    )

    result = pl.pallas_call(
        kernel,
        grid_spec=grid_spec,
        out_shape=out_shape,
        compiler_params=pltpu.CompilerParams(
            dimension_semantics=("parallel", "parallel"),
            vmem_limit_bytes=int(vmem_budget_bytes)),
        cost_estimate=cost,
    )(q_lens, k_lens, q, k, v)

    if emit_att_scores:
        output, scores = result
    else:
        output, scores = result, None
    return {'output': output, 'att_scores': scores}


def _reference(q, k, v, q_lens, k_lens, heads):
    """Pure-JAX reference mirroring the PyTorch forward (dot, end-padded)."""
    bs, q_len, q_ts = q.shape
    _, k_len, k_ts = k.shape
    _, _, v_ts = v.shape
    d_q, d_k, d_v = q_ts // heads, k_ts // heads, v_ts // heads
    prec = jax.lax.Precision.HIGHEST
    qh = q.reshape(bs, q_len, heads, d_q).transpose(0, 2, 1, 3)
    kh = k.reshape(bs, k_len, heads, d_k).transpose(0, 2, 1, 3)
    vh = v.reshape(bs, k_len, heads, d_v).transpose(0, 2, 1, 3)
    scores = jnp.einsum('bhqd,bhkd->bhqk', qh, kh, precision=prec) / math.sqrt(d_q)
    k_mask = (jnp.arange(k_len)[None, :] < k_lens[:, None])[:, None, None, :]
    scores = jnp.where(k_mask, scores, -1000000000.0)
    scores = jax.nn.softmax(scores, axis=3)
    att = jnp.einsum('bhqk,bhkd->bhqd', scores, vh, precision=prec)
    q_mask = (jnp.arange(q_len)[None, :] < q_lens[:, None])[:, None, :, None]
    att = jnp.where(q_mask, att, 0.0)
    out = att.transpose(0, 2, 1, 3).reshape(bs, q_len, v_ts)
    return out, scores


if __name__ == "__main__":
    bs, heads = 2, 4
    q_len, k_len = 16, 8
    q_ts = k_ts = v_ts = 32   # head_dim = 8

    key = jax.random.PRNGKey(0)
    kq, kk, kv = jax.random.split(key, 3)
    q = jax.random.normal(kq, (bs, q_len, q_ts), dtype=jnp.float32)
    k = jax.random.normal(kk, (bs, k_len, k_ts), dtype=jnp.float32)
    v = jax.random.normal(kv, (bs, k_len, v_ts), dtype=jnp.float32)
    q_sequence_lengths = jnp.array([q_len, 10], dtype=jnp.int32)
    k_sequence_lengths = jnp.array([k_len, 5], dtype=jnp.int32)

    ref_out, ref_att = _reference(q, k, v, q_sequence_lengths,
                                  k_sequence_lengths, heads)

    # Run A: exact f32 MXU math, att_scores emitted, q axis tiled (q_block=8
    # -> 2 q tiles), matching the PyTorch module numerics closely.
    res = multi_head_attention(q, k, v, q_sequence_lengths,
                               k_sequence_lengths, heads=heads,
                               mxu_dtype=jnp.float32, q_block=8)
    out = jax.block_until_ready(res['output'])
    att = jax.block_until_ready(res['att_scores'])
    assert out.shape == (bs, q_len, v_ts)
    assert att.shape == (bs, heads, q_len, k_len)
    assert jnp.allclose(out, ref_out, atol=1e-4, rtol=1e-4)
    assert jnp.allclose(att, ref_att, atol=1e-4, rtol=1e-4)

    # Run B: default fast path -- bf16 MXU operands (f32 accumulation) and no
    # att_scores materialization (kernel becomes MXU-bound, not store-bound).
    res_fast = multi_head_attention(q, k, v, q_sequence_lengths,
                                    k_sequence_lengths, heads=heads,
                                    emit_att_scores=False)
    out_fast = jax.block_until_ready(res_fast['output'])
    assert res_fast['att_scores'] is None
    assert out_fast.shape == (bs, q_len, v_ts)
    assert jnp.allclose(out_fast, ref_out, atol=5e-2, rtol=5e-2)

    print("KERNEL_OK")
</pallas_src>

<mosaic_0001>
module attributes {stable_mosaic.version = 11 : i64} {
  func.func @_mha_dot_kernel(%arg0: i32, %arg1: i32, %arg2: memref<2xi32, #tpu.memory_space<smem>>, %arg3: memref<2xi32, #tpu.memory_space<smem>>, %arg4: memref<1x8x32xf32, #tpu.memory_space<vmem>>, %arg5: memref<1x8x32xf32, #tpu.memory_space<vmem>>, %arg6: memref<1x8x32xf32, #tpu.memory_space<vmem>>, %arg7: memref<1x8x32xf32, #tpu.memory_space<vmem>>, %arg8: memref<1x4x8x8xf32, #tpu.memory_space<vmem>>) attributes {dimension_semantics = [#tpu.dimension_semantics<parallel>, #tpu.dimension_semantics<parallel>], iteration_bounds = array<i64: 2, 2>, scalar_prefetch = 2 : i64, scratch_operands = 0 : i64, tpu.core_type = #tpu.core_type<tc>, window_params = [{transform_indices = @transform_0, window_bounds = array<i64: 1, 8, 32>}, {transform_indices = @transform_1, window_bounds = array<i64: 1, 8, 32>}, {transform_indices = @transform_2, window_bounds = array<i64: 1, 8, 32>}, {transform_indices = @transform_3, window_bounds = array<i64: 1, 8, 32>}, {transform_indices = @transform_4, window_bounds = array<i64: 1, 4, 8, 8>}]} {
    %0 = arith.index_cast %arg0 : i32 to index
    %1 = memref.load %arg3[%0] : memref<2xi32, #tpu.memory_space<smem>>
    %2 = arith.index_cast %arg0 : i32 to index
    %3 = memref.load %arg2[%2] : memref<2xi32, #tpu.memory_space<smem>>
    %4 = tpu.iota {dimensions = array<i32: 1>} : vector<1x8xi32>
    %5 = vector.broadcast %1 : i32 to vector<1x8xi32>
    %6 = arith.cmpi slt, %4, %5 : vector<1x8xi32>
    %7 = tpu.iota {dimensions = array<i32: 0>} : vector<8x1xi32>
    %c8_i32 = arith.constant 8 : i32
    %8 = arith.muli %arg1, %c8_i32 : i32
    %9 = vector.broadcast %8 : i32 to vector<8x1xi32>
    %10 = arith.addi %7, %9 : vector<8x1xi32>
    %11 = vector.broadcast %3 : i32 to vector<8x1xi32>
    %12 = arith.cmpi slt, %10, %11 : vector<8x1xi32>
    %c0 = arith.constant 0 : index
    %c0_0 = arith.constant 0 : index
    %c0_1 = arith.constant 0 : index
    %13 = vector.load %arg4[%c0, %c0_0, %c0_1] : memref<1x8x32xf32, #tpu.memory_space<vmem>>, vector<1x8x8xf32>
    %14 = vector.shape_cast %13 : vector<1x8x8xf32> to vector<8x8xf32>
    %c0_2 = arith.constant 0 : index
    %c0_3 = arith.constant 0 : index
    %c0_4 = arith.constant 0 : index
    %15 = vector.load %arg5[%c0_2, %c0_3, %c0_4] : memref<1x8x32xf32, #tpu.memory_space<vmem>>, vector<1x8x8xf32>
    %16 = vector.shape_cast %15 : vector<1x8x8xf32> to vector<8x8xf32>
    %c0_5 = arith.constant 0 : index
    %c0_6 = arith.constant 0 : index
    %c0_7 = arith.constant 0 : index
    %17 = vector.load %arg6[%c0_5, %c0_6, %c0_7] : memref<1x8x32xf32, #tpu.memory_space<vmem>>, vector<1x8x8xf32>
    %18 = vector.shape_cast %17 : vector<1x8x8xf32> to vector<8x8xf32>
    %cst = arith.constant 0.353553385 : f32
    %19 = vector.broadcast %cst : f32 to vector<8x8xf32>
    %20 = arith.mulf %14, %19 : vector<8x8xf32>
    %cst_8 = arith.constant dense<0.000000e+00> : vector<8x8xf32>
    %21 = tpu.matmul %20, %16, %cst_8 {dimension_numbers = #tpu.dot_dimension_numbers<[1], [1], [0], [0], [0, 0, 1, 0], [], []>} : vector<8x8xf32>, vector<8x8xf32>, vector<8x8xf32> -> vector<8x8xf32>
    %cst_9 = arith.constant -1.000000e+09 : f32
    %22 = vector.shape_cast %6 : vector<1x8xi1> to vector<1x8xi1>
    %23 = vector.broadcast %22 : vector<1x8xi1> to vector<8x8xi1>
    %24 = vector.broadcast %cst_9 : f32 to vector<8x8xf32>
    %25 = arith.select %23, %21, %24 : vector<8x8xi1>, vector<8x8xf32>
    %cst_10 = arith.constant dense<0xFF800000> : vector<8xf32>
    %26 = vector.multi_reduction <maximumf>, %25, %cst_10 [1] : vector<8x8xf32> to vector<8xf32>
    %27 = vector.shape_cast %26 : vector<8xf32> to vector<8x1xf32>
    %28 = vector.broadcast %27 : vector<8x1xf32> to vector<8x8xf32>
    %29 = arith.subf %25, %28 : vector<8x8xf32>
    %30 = math.exp %29 : vector<8x8xf32>
    %cst_11 = arith.constant dense<0.000000e+00> : vector<8xf32>
    %31 = vector.multi_reduction <add>, %30, %cst_11 [1] : vector<8x8xf32> to vector<8xf32>
    %32 = vector.shape_cast %31 : vector<8xf32> to vector<8x1xf32>
    %cst_12 = arith.constant 1.000000e+00 : f32
    %33 = vector.broadcast %cst_12 : f32 to vector<8x1xf32>
    %34 = arith.divf %33, %32 : vector<8x1xf32>
    %35 = vector.broadcast %34 : vector<8x1xf32> to vector<8x8xf32>
    %36 = arith.mulf %30, %35 : vector<8x8xf32>
    %c0_13 = arith.constant 0 : index
    %c0_14 = arith.constant 0 : index
    %c0_15 = arith.constant 0 : index
    %c0_16 = arith.constant 0 : index
    %37 = vector.load %arg8[%c0_13, %c0_14, %c0_15, %c0_16] : memref<1x4x8x8xf32, #tpu.memory_space<vmem>>, vector<1x1x8x8xf32>
    %38 = vector.shape_cast %37 : vector<1x1x8x8xf32> to vector<8x8xf32>
    %39 = vector.shape_cast %36 : vector<8x8xf32> to vector<1x1x8x8xf32>
    tpu.vector_store %arg8[%c0_13, %c0_14, %c0_15, %c0_16], %39 {strides = array<i32>} : memref<1x4x8x8xf32, #tpu.memory_space<vmem>>, vector<1x1x8x8xf32>,
    %cst_17 = arith.constant dense<0.000000e+00> : vector<8x8xf32>
    %40 = tpu.matmul %36, %18, %cst_17 {dimension_numbers = #tpu.dot_dimension_numbers<[1], [0], [0], [1], [0, 0, 1, 1], [], []>} : vector<8x8xf32>, vector<8x8xf32>, vector<8x8xf32> -> vector<8x8xf32>
    %cst_18 = arith.constant 0.000000e+00 : f32
    %41 = vector.shape_cast %12 : vector<8x1xi1> to vector<8x1xi1>
    %42 = vector.broadcast %41 : vector<8x1xi1> to vector<8x8xi1>
    %43 = vector.broadcast %cst_18 : f32 to vector<8x8xf32>
    %44 = arith.select %42, %40, %43 : vector<8x8xi1>, vector<8x8xf32>
    %c0_19 = arith.constant 0 : index
    %c0_20 = arith.constant 0 : index
    %c0_21 = arith.constant 0 : index
    %45 = vector.load %arg7[%c0_19, %c0_20, %c0_21] : memref<1x8x32xf32, #tpu.memory_space<vmem>>, vector<1x8x8xf32>
    %46 = vector.shape_cast %45 : vector<1x8x8xf32> to vector<8x8xf32>
    %47 = vector.shape_cast %44 : vector<8x8xf32> to vector<1x8x8xf32>
    tpu.vector_store %arg7[%c0_19, %c0_20, %c0_21], %47 {strides = array<i32>} : memref<1x8x32xf32, #tpu.memory_space<vmem>>, vector<1x8x8xf32>,
    %c0_22 = arith.constant 0 : index
    %c0_23 = arith.constant 0 : index
    %c8 = arith.constant 8 : index
    %48 = vector.load %arg4[%c0_22, %c0_23, %c8] : memref<1x8x32xf32, #tpu.memory_space<vmem>>, vector<1x8x8xf32>
    %49 = vector.shape_cast %48 : vector<1x8x8xf32> to vector<8x8xf32>
    %c0_24 = arith.constant 0 : index
    %c0_25 = arith.constant 0 : index
    %c8_26 = arith.constant 8 : index
    %50 = vector.load %arg5[%c0_24, %c0_25, %c8_26] : memref<1x8x32xf32, #tpu.memory_space<vmem>>, vector<1x8x8xf32>
    %51 = vector.shape_cast %50 : vector<1x8x8xf32> to vector<8x8xf32>
    %c0_27 = arith.constant 0 : index
    %c0_28 = arith.constant 0 : index
    %c8_29 = arith.constant 8 : index
    %52 = vector.load %arg6[%c0_27, %c0_28, %c8_29] : memref<1x8x32xf32, #tpu.memory_space<vmem>>, vector<1x8x8xf32>
    %53 = vector.shape_cast %52 : vector<1x8x8xf32> to vector<8x8xf32>
    %cst_30 = arith.constant 0.353553385 : f32
    %54 = vector.broadcast %cst_30 : f32 to vector<8x8xf32>
    %55 = arith.mulf %49, %54 : vector<8x8xf32>
    %cst_31 = arith.constant dense<0.000000e+00> : vector<8x8xf32>
    %56 = tpu.matmul %55, %51, %cst_31 {dimension_numbers = #tpu.dot_dimension_numbers<[1], [1], [0], [0], [0, 0, 1, 0], [], []>} : vector<8x8xf32>, vector<8x8xf32>, vector<8x8xf32> -> vector<8x8xf32>
    %cst_32 = arith.constant -1.000000e+09 : f32
    %57 = vector.shape_cast %6 : vector<1x8xi1> to vector<1x8xi1>
    %58 = vector.broadcast %57 : vector<1x8xi1> to vector<8x8xi1>
    %59 = vector.broadcast %cst_32 : f32 to vector<8x8xf32>
    %60 = arith.select %58, %56, %59 : vector<8x8xi1>, vector<8x8xf32>
    %cst_33 = arith.constant dense<0xFF800000> : vector<8xf32>
    %61 = vector.multi_reduction <maximumf>, %60, %cst_33 [1] : vector<8x8xf32> to vector<8xf32>
    %62 = vector.shape_cast %61 : vector<8xf32> to vector<8x1xf32>
    %63 = vector.broadcast %62 : vector<8x1xf32> to vector<8x8xf32>
    %64 = arith.subf %60, %63 : vector<8x8xf32>
    %65 = math.exp %64 : vector<8x8xf32>
    %cst_34 = arith.constant dense<0.000000e+00> : vector<8xf32>
    %66 = vector.multi_reduction <add>, %65, %cst_34 [1] : vector<8x8xf32> to vector<8xf32>
    %67 = vector.shape_cast %66 : vector<8xf32> to vector<8x1xf32>
    %cst_35 = arith.constant 1.000000e+00 : f32
    %68 = vector.broadcast %cst_35 : f32 to vector<8x1xf32>
    %69 = arith.divf %68, %67 : vector<8x1xf32>
    %70 = vector.broadcast %69 : vector<8x1xf32> to vector<8x8xf32>
    %71 = arith.mulf %65, %70 : vector<8x8xf32>
    %c0_36 = arith.constant 0 : index
    %c1 = arith.constant 1 : index
    %c0_37 = arith.constant 0 : index
    %c0_38 = arith.constant 0 : index
    %72 = vector.load %arg8[%c0_36, %c1, %c0_37, %c0_38] : memref<1x4x8x8xf32, #tpu.memory_space<vmem>>, vector<1x1x8x8xf32>
    %73 = vector.shape_cast %72 : vector<1x1x8x8xf32> to vector<8x8xf32>
    %74 = vector.shape_cast %71 : vector<8x8xf32> to vector<1x1x8x8xf32>
    tpu.vector_store %arg8[%c0_36, %c1, %c0_37, %c0_38], %74 {strides = array<i32>} : memref<1x4x8x8xf32, #tpu.memory_space<vmem>>, vector<1x1x8x8xf32>,
    %cst_39 = arith.constant dense<0.000000e+00> : vector<8x8xf32>
    %75 = tpu.matmul %71, %53, %cst_39 {dimension_numbers = #tpu.dot_dimension_numbers<[1], [0], [0], [1], [0, 0, 1, 1], [], []>} : vector<8x8xf32>, vector<8x8xf32>, vector<8x8xf32> -> vector<8x8xf32>
    %cst_40 = arith.constant 0.000000e+00 : f32
    %76 = vector.shape_cast %12 : vector<8x1xi1> to vector<8x1xi1>
    %77 = vector.broadcast %76 : vector<8x1xi1> to vector<8x8xi1>
    %78 = vector.broadcast %cst_40 : f32 to vector<8x8xf32>
    %79 = arith.select %77, %75, %78 : vector<8x8xi1>, vector<8x8xf32>
    %c0_41 = arith.constant 0 : index
    %c0_42 = arith.constant 0 : index
    %c8_43 = arith.constant 8 : index
    %80 = vector.load %arg7[%c0_41, %c0_42, %c8_43] : memref<1x8x32xf32, #tpu.memory_space<vmem>>, vector<1x8x8xf32>
    %81 = vector.shape_cast %80 : vector<1x8x8xf32> to vector<8x8xf32>
    %82 = vector.shape_cast %79 : vector<8x8xf32> to vector<1x8x8xf32>
    tpu.vector_store %arg7[%c0_41, %c0_42, %c8_43], %82 {strides = array<i32>} : memref<1x8x32xf32, #tpu.memory_space<vmem>>, vector<1x8x8xf32>,
    %c0_44 = arith.constant 0 : index
    %c0_45 = arith.constant 0 : index
    %c16 = arith.constant 16 : index
    %83 = vector.load %arg4[%c0_44, %c0_45, %c16] : memref<1x8x32xf32, #tpu.memory_space<vmem>>, vector<1x8x8xf32>
    %84 = vector.shape_cast %83 : vector<1x8x8xf32> to vector<8x8xf32>
    %c0_46 = arith.constant 0 : index
    %c0_47 = arith.constant 0 : index
    %c16_48 = arith.constant 16 : index
    %85 = vector.load %arg5[%c0_46, %c0_47, %c16_48] : memref<1x8x32xf32, #tpu.memory_space<vmem>>, vector<1x8x8xf32>
    %86 = vector.shape_cast %85 : vector<1x8x8xf32> to vector<8x8xf32>
    %c0_49 = arith.constant 0 : index
    %c0_50 = arith.constant 0 : index
    %c16_51 = arith.constant 16 : index
    %87 = vector.load %arg6[%c0_49, %c0_50, %c16_51] : memref<1x8x32xf32, #tpu.memory_space<vmem>>, vector<1x8x8xf32>
    %88 = vector.shape_cast %87 : vector<1x8x8xf32> to vector<8x8xf32>
    %cst_52 = arith.constant 0.353553385 : f32
    %89 = vector.broadcast %cst_52 : f32 to vector<8x8xf32>
    %90 = arith.mulf %84, %89 : vector<8x8xf32>
    %cst_53 = arith.constant dense<0.000000e+00> : vector<8x8xf32>
    %91 = tpu.matmul %90, %86, %cst_53 {dimension_numbers = #tpu.dot_dimension_numbers<[1], [1], [0], [0], [0, 0, 1, 0], [], []>} : vector<8x8xf32>, vector<8x8xf32>, vector<8x8xf32> -> vector<8x8xf32>
    %cst_54 = arith.constant -1.000000e+09 : f32
    %92 = vector.shape_cast %6 : vector<1x8xi1> to vector<1x8xi1>
    %93 = vector.broadcast %92 : vector<1x8xi1> to vector<8x8xi1>
    %94 = vector.broadcast %cst_54 : f32 to vector<8x8xf32>
    %95 = arith.select %93, %91, %94 : vector<8x8xi1>, vector<8x8xf32>
    %cst_55 = arith.constant dense<0xFF800000> : vector<8xf32>
    %96 = vector.multi_reduction <maximumf>, %95, %cst_55 [1] : vector<8x8xf32> to vector<8xf32>
    %97 = vector.shape_cast %96 : vector<8xf32> to vector<8x1xf32>
    %98 = vector.broadcast %97 : vector<8x1xf32> to vector<8x8xf32>
    %99 = arith.subf %95, %98 : vector<8x8xf32>
    %100 = math.exp %99 : vector<8x8xf32>
    %cst_56 = arith.constant dense<0.000000e+00> : vector<8xf32>
    %101 = vector.multi_reduction <add>, %100, %cst_56 [1] : vector<8x8xf32> to vector<8xf32>
    %102 = vector.shape_cast %101 : vector<8xf32> to vector<8x1xf32>
    %cst_57 = arith.constant 1.000000e+00 : f32
    %103 = vector.broadcast %cst_57 : f32 to vector<8x1xf32>
    %104 = arith.divf %103, %102 : vector<8x1xf32>
    %105 = vector.broadcast %104 : vector<8x1xf32> to vector<8x8xf32>
    %106 = arith.mulf %100, %105 : vector<8x8xf32>
    %c0_58 = arith.constant 0 : index
    %c2 = arith.constant 2 : index
    %c0_59 = arith.constant 0 : index
    %c0_60 = arith.constant 0 : index
    %107 = vector.load %arg8[%c0_58, %c2, %c0_59, %c0_60] : memref<1x4x8x8xf32, #tpu.memory_space<vmem>>, vector<1x1x8x8xf32>
    %108 = vector.shape_cast %107 : vector<1x1x8x8xf32> to vector<8x8xf32>
    %109 = vector.shape_cast %106 : vector<8x8xf32> to vector<1x1x8x8xf32>
    tpu.vector_store %arg8[%c0_58, %c2, %c0_59, %c0_60], %109 {strides = array<i32>} : memref<1x4x8x8xf32, #tpu.memory_space<vmem>>, vector<1x1x8x8xf32>,
    %cst_61 = arith.constant dense<0.000000e+00> : vector<8x8xf32>
    %110 = tpu.matmul %106, %88, %cst_61 {dimension_numbers = #tpu.dot_dimension_numbers<[1], [0], [0], [1], [0, 0, 1, 1], [], []>} : vector<8x8xf32>, vector<8x8xf32>, vector<8x8xf32> -> vector<8x8xf32>
    %cst_62 = arith.constant 0.000000e+00 : f32
    %111 = vector.shape_cast %12 : vector<8x1xi1> to vector<8x1xi1>
    %112 = vector.broadcast %111 : vector<8x1xi1> to vector<8x8xi1>
    %113 = vector.broadcast %cst_62 : f32 to vector<8x8xf32>
    %114 = arith.select %112, %110, %113 : vector<8x8xi1>, vector<8x8xf32>
    %c0_63 = arith.constant 0 : index
    %c0_64 = arith.constant 0 : index
    %c16_65 = arith.constant 16 : index
    %115 = vector.load %arg7[%c0_63, %c0_64, %c16_65] : memref<1x8x32xf32, #tpu.memory_space<vmem>>, vector<1x8x8xf32>
    %116 = vector.shape_cast %115 : vector<1x8x8xf32> to vector<8x8xf32>
    %117 = vector.shape_cast %114 : vector<8x8xf32> to vector<1x8x8xf32>
    tpu.vector_store %arg7[%c0_63, %c0_64, %c16_65], %117 {strides = array<i32>} : memref<1x8x32xf32, #tpu.memory_space<vmem>>, vector<1x8x8xf32>,
    %c0_66 = arith.constant 0 : index
    %c0_67 = arith.constant 0 : index
    %c24 = arith.constant 24 : index
    %118 = vector.load %arg4[%c0_66, %c0_67, %c24] : memref<1x8x32xf32, #tpu.memory_space<vmem>>, vector<1x8x8xf32>
    %119 = vector.shape_cast %118 : vector<1x8x8xf32> to vector<8x8xf32>
    %c0_68 = arith.constant 0 : index
    %c0_69 = arith.constant 0 : index
    %c24_70 = arith.constant 24 : index
    %120 = vector.load %arg5[%c0_68, %c0_69, %c24_70] : memref<1x8x32xf32, #tpu.memory_space<vmem>>, vector<1x8x8xf32>
    %121 = vector.shape_cast %120 : vector<1x8x8xf32> to vector<8x8xf32>
    %c0_71 = arith.constant 0 : index
    %c0_72 = arith.constant 0 : index
    %c24_73 = arith.constant 24 : index
    %122 = vector.load %arg6[%c0_71, %c0_72, %c24_73] : memref<1x8x32xf32, #tpu.memory_space<vmem>>, vector<1x8x8xf32>
    %123 = vector.shape_cast %122 : vector<1x8x8xf32> to vector<8x8xf32>
    %cst_74 = arith.constant 0.353553385 : f32
    %124 = vector.broadcast %cst_74 : f32 to vector<8x8xf32>
    %125 = arith.mulf %119, %124 : vector<8x8xf32>
    %cst_75 = arith.constant dense<0.000000e+00> : vector<8x8xf32>
    %126 = tpu.matmul %125, %121, %cst_75 {dimension_numbers = #tpu.dot_dimension_numbers<[1], [1], [0], [0], [0, 0, 1, 0], [], []>} : vector<8x8xf32>, vector<8x8xf32>, vector<8x8xf32> -> vector<8x8xf32>
    %cst_76 = arith.constant -1.000000e+09 : f32
    %127 = vector.shape_cast %6 : vector<1x8xi1> to vector<1x8xi1>
    %128 = vector.broadcast %127 : vector<1x8xi1> to vector<8x8xi1>
    %129 = vector.broadcast %cst_76 : f32 to vector<8x8xf32>
    %130 = arith.select %128, %126, %129 : vector<8x8xi1>, vector<8x8xf32>
    %cst_77 = arith.constant dense<0xFF800000> : vector<8xf32>
    %131 = vector.multi_reduction <maximumf>, %130, %cst_77 [1] : vector<8x8xf32> to vector<8xf32>
    %132 = vector.shape_cast %131 : vector<8xf32> to vector<8x1xf32>
    %133 = vector.broadcast %132 : vector<8x1xf32> to vector<8x8xf32>
    %134 = arith.subf %130, %133 : vector<8x8xf32>
    %135 = math.exp %134 : vector<8x8xf32>
    %cst_78 = arith.constant dense<0.000000e+00> : vector<8xf32>
    %136 = vector.multi_reduction <add>, %135, %cst_78 [1] : vector<8x8xf32> to vector<8xf32>
    %137 = vector.shape_cast %136 : vector<8xf32> to vector<8x1xf32>
    %cst_79 = arith.constant 1.000000e+00 : f32
    %138 = vector.broadcast %cst_79 : f32 to vector<8x1xf32>
    %139 = arith.divf %138, %137 : vector<8x1xf32>
    %140 = vector.broadcast %139 : vector<8x1xf32> to vector<8x8xf32>
    %141 = arith.mulf %135, %140 : vector<8x8xf32>
    %c0_80 = arith.constant 0 : index
    %c3 = arith.constant 3 : index
    %c0_81 = arith.constant 0 : index
    %c0_82 = arith.constant 0 : index
    %142 = vector.load %arg8[%c0_80, %c3, %c0_81, %c0_82] : memref<1x4x8x8xf32, #tpu.memory_space<vmem>>, vector<1x1x8x8xf32>
    %143 = vector.shape_cast %142 : vector<1x1x8x8xf32> to vector<8x8xf32>
    %144 = vector.shape_cast %141 : vector<8x8xf32> to vector<1x1x8x8xf32>
    tpu.vector_store %arg8[%c0_80, %c3, %c0_81, %c0_82], %144 {strides = array<i32>} : memref<1x4x8x8xf32, #tpu.memory_space<vmem>>, vector<1x1x8x8xf32>,
    %cst_83 = arith.constant dense<0.000000e+00> : vector<8x8xf32>
    %145 = tpu.matmul %141, %123, %cst_83 {dimension_numbers = #tpu.dot_dimension_numbers<[1], [0], [0], [1], [0, 0, 1, 1], [], []>} : vector<8x8xf32>, vector<8x8xf32>, vector<8x8xf32> -> vector<8x8xf32>
    %cst_84 = arith.constant 0.000000e+00 : f32
    %146 = vector.shape_cast %12 : vector<8x1xi1> to vector<8x1xi1>
    %147 = vector.broadcast %146 : vector<8x1xi1> to vector<8x8xi1>
    %148 = vector.broadcast %cst_84 : f32 to vector<8x8xf32>
    %149 = arith.select %147, %145, %148 : vector<8x8xi1>, vector<8x8xf32>
    %c0_85 = arith.constant 0 : index
    %c0_86 = arith.constant 0 : index
    %c24_87 = arith.constant 24 : index
    %150 = vector.load %arg7[%c0_85, %c0_86, %c24_87] : memref<1x8x32xf32, #tpu.memory_space<vmem>>, vector<1x8x8xf32>
    %151 = vector.shape_cast %150 : vector<1x8x8xf32> to vector<8x8xf32>
    %152 = vector.shape_cast %149 : vector<8x8xf32> to vector<1x8x8xf32>
    tpu.vector_store %arg7[%c0_85, %c0_86, %c24_87], %152 {strides = array<i32>} : memref<1x8x32xf32, #tpu.memory_space<vmem>>, vector<1x8x8xf32>,
    return
  }
  func.func @transform_0(%arg0: i32, %arg1: i32, %arg2: memref<2xi32, #tpu.memory_space<smem>>, %arg3: memref<2xi32, #tpu.memory_space<smem>>) -> (i32, i32, i32) {
    %c0_i32 = arith.constant 0 : i32
    %c0_i32_0 = arith.constant 0 : i32
    return %arg0, %arg1, %c0_i32 : i32, i32, i32
  }
  func.func @transform_1(%arg0: i32, %arg1: i32, %arg2: memref<2xi32, #tpu.memory_space<smem>>, %arg3: memref<2xi32, #tpu.memory_space<smem>>) -> (i32, i32, i32) {
    %c0_i32 = arith.constant 0 : i32
    %c0_i32_0 = arith.constant 0 : i32
    %c0_i32_1 = arith.constant 0 : i32
    return %arg0, %c0_i32, %c0_i32_0 : i32, i32, i32
  }
  func.func @transform_2(%arg0: i32, %arg1: i32, %arg2: memref<2xi32, #tpu.memory_space<smem>>, %arg3: memref<2xi32, #tpu.memory_space<smem>>) -> (i32, i32, i32) {
    %c0_i32 = arith.constant 0 : i32
    %c0_i32_0 = arith.constant 0 : i32
    %c0_i32_1 = arith.constant 0 : i32
    return %arg0, %c0_i32, %c0_i32_0 : i32, i32, i32
  }
  func.func @transform_3(%arg0: i32, %arg1: i32, %arg2: memref<2xi32, #tpu.memory_space<smem>>, %arg3: memref<2xi32, #tpu.memory_space<smem>>) -> (i32, i32, i32) {
    %c0_i32 = arith.constant 0 : i32
    %c0_i32_0 = arith.constant 0 : i32
    return %arg0, %arg1, %c0_i32 : i32, i32, i32
  }
  func.func @transform_4(%arg0: i32, %arg1: i32, %arg2: memref<2xi32, #tpu.memory_space<smem>>, %arg3: memref<2xi32, #tpu.memory_space<smem>>) -> (i32, i32, i32, i32) {
    %c0_i32 = arith.constant 0 : i32
    %c0_i32_0 = arith.constant 0 : i32
    %c0_i32_1 = arith.constant 0 : i32
    return %arg0, %c0_i32, %arg1, %c0_i32_0 : i32, i32, i32, i32
  }
}

</mosaic_0001>

<llo_original>
// kernel: tpu_custom_call.1
$region0: #{tpu_custom_call.1}
  #allocation0 [shape = 'u32[]', space=smem, size = 0x4, offset = 0x4, fixed_abs, tag = 'smem constant byte address 0x4 - core index']
  #allocation1 [shape = 'u32[144,128]{1,0:T(1,128)}', space=vmem, size = 0x12000, scoped, tag = 'internal scratch']
  #allocation2 [shape = 's32[1]{0}', space=sflag, size = 0x4, scoped, tag = 'scoped memory for tpu_custom_call.1']
  #allocation3 [shape = 'u8[512]{0}', space=smem, size = 0x200, scoped, tag = 'prefetched SMEM operand 0']
  #allocation4 [shape = 'u8[512]{0}', space=smem, size = 0x200, scoped, tag = 'prefetched SMEM operand 1']
  %s0 = inlined_call_operand.hbm [shape: s32[2], index: 0, kind: input, shape index: {}]
  %s1 = inlined_call_operand.vmem [shape: s32[2], index: 1, kind: input, shape index: {}]
  %s2 = inlined_call_operand.hbm [shape: f32[2,16,32], index: 2, kind: input, shape index: {}]
  %s3 = inlined_call_operand.hbm [shape: f32[2,8,32], index: 3, kind: input, shape index: {}]
  %s4 = inlined_call_operand.hbm [shape: f32[2,8,32], index: 4, kind: input, shape index: {}]
  %s5 = inlined_call_operand.hbm [shape: f32[2,16,32], index: 5, kind: output, shape index: {0}]
  %s6 = inlined_call_operand.vmem [shape: f32[2,4,16,8], index: 6, kind: output, shape index: {1}]
  %7 = xla_tuple %s5, %s6
  %s8 = sld [smem:[#allocation0]]
  $region99: #{tpu_custom_call.1} parent=0
    _
  %s10 = ssub.s32 1, %s8
  %s11 = scalar_select 0, %s10, %s8
  %13 = dma.hbm_to_smem %s0, 16, [#allocation3], [#allocation2]
  %s14 = sshll.u32 %s1, 4
  %s15 = int_to_ptr.vmem [resolvable:$true] %s14
  %17 = dma.vmem_to_smem %s15, 16, [#allocation4], [#allocation2]
  %18 = dma.done [#allocation2], 32
  %19 = sfence
  $region1: #{tpu_custom_call.1} parent=0
    #allocation5 [shape = 'u8[8192]{0}', space=vmem, size = 0x2000, scoped, tag = 'input window, operand 2']
    #allocation6 [shape = 's32[2]{0}', space=sflag, size = 0x8, scoped, tag = 'scoped memory for tpu_custom_call.1']
    #allocation7 [shape = 's32[2]{0}', space=sflag, size = 0x8, scoped, tag = 'scoped memory for tpu_custom_call.1']
    #allocation8 [shape = 'u8[8192]{0}', space=vmem, size = 0x2000, scoped, tag = 'input window, operand 3']
    #allocation9 [shape = 's32[2]{0}', space=sflag, size = 0x8, scoped, tag = 'scoped memory for tpu_custom_call.1']
    #allocation10 [shape = 'u8[8192]{0}', space=vmem, size = 0x2000, scoped, tag = 'input window, operand 4']
    #allocation11 [shape = 'u8[8192]{0}', space=vmem, size = 0x2000, scoped, tag = 'output window, operand 0']
    #allocation12 [shape = 'u8[32768]{0}', space=vmem, size = 0x8000, scoped, tag = 'output window, operand 1']
    %20 = vsyncpa [#allocation6], 0
    %s21 = scalar_lea.sflag [#allocation6], 1
    %22 = vsyncpa %s21, 0
    %23 = vsyncpa [#allocation9], 0
    %s24 = scalar_lea.sflag [#allocation9], 1
    %25 = vsyncpa %s24, 0
    %26 = vsyncpa [#allocation7], 0
    %s27 = scalar_lea.sflag [#allocation7], 1
    %28 = vsyncpa %s27, 0
    loop: start=0, step=1, limit=6
    $region2: #{tpu_custom_call.1} parent=1 // loop_pre_header
      _
    $region3: #{tpu_custom_call.1} parent=1 // loop_header
      %s30 = sphi 0, %s34
      %p31 = scmp.ge.s32.totalorder %s30, 6
      %s37 = sphi 0, %s49
      %s38 = sphi 0, %s45
      %s39 = sphi 0, %s37
      %s40 = sphi 0, %s38
      %s41 = sphi 0, %s39
      %s42 = sphi 0, %s40
      %s54 = sphi 0, %s56
      %s57 = sphi 0, %s54
      %s58 = sphi 0, %s57
      %s74 = sphi 0, %s58
      %s80 = sphi 0, %s82
      %s83 = sphi 0, %s80
      %s84 = sphi 0, %s83
      %s100 = sphi 0, %s84
      %s106 = sphi 0, %s108
      %s109 = sphi 0, %s106
      %s110 = sphi 0, %s109
      %s126 = sphi 0, %s110
      %s134 = sphi 0, %s136
      %s137 = sphi 0, %s134
      %s138 = sphi 0, %s137
      %s154 = sphi 0, %s138
      %s162 = sphi 0, %s164
      %s165 = sphi 0, %s162
      %s166 = sphi 0, %s165
      %s182 = sphi 0, %s166
    $region4: #{tpu_custom_call.1} parent=1 // loop_header_branch
      %33 = sbr.rel (%p31) target = $region8
    $region5: #{tpu_custom_call.1} parent=1 // loop_body
      %s35 = ssub.s32 %s30, 1
      %s36 = ssub.s32 %s30, 2
      %s43 = sadd.s32 1, %s38
      %p44 = scmp.ge.s32.totalorder %s43, 2
      %s45 = scalar_select %p44, 0, %s43
      %s46 = sadd.s32 1, %s37
      %s47 = scalar_select %p44, %s46, %s37
      %p48 = scmp.ge.s32.totalorder %s47, 2
      %s49 = scalar_select %p48, 0, %s47
      %s50 = ssub.s32 %s37, %s49
      %s51 = ssub.s32 %s38, %s45
      %s52 = sor.u32 %s50, %s51
      %p53 = scmp.eq.s32.totalorder %s52, 0
      %s55 = sadd.s32 %s54, 1
      %s56 = scalar_select %p53, %s54, %s55
      %p59 = pneg %p53
      %p60 = scmp.eq.s32.totalorder %s30, 3
      %p61 = por %p59, %p60
      %p62 = scmp.ne.s32.totalorder %s54, %s57
      %p63 = scmp.eq.s32.totalorder %s30, 0
      %p64 = por %p62, %p63
      %p65 = scmp.ne.s32.totalorder %s54, %s57
      %p66 = scmp.eq.s32.totalorder %s35, 3
      %p67 = por %p65, %p66
      %p68 = scmp.ne.s32.totalorder %s57, %s58
      %p69 = scmp.eq.s32.totalorder %s35, 0
      %p70 = por %p68, %p69
      %p71 = scmp.ne.s32.totalorder %s57, %s58
      %p72 = scmp.eq.s32.totalorder %s36, 3
      %p73 = por %p71, %p72
      %p75 = scmp.ne.s32.totalorder %s58, %s74
      %p76 = scmp.eq.s32.totalorder %s36, 0
      %p77 = por %p75, %p76
      %s78 = ssub.s32 %s37, %s49
      %p79 = scmp.eq.s32.totalorder %s78, 0
      %s81 = sadd.s32 %s80, 1
      %s82 = scalar_select %p79, %s80, %s81
      %p85 = pneg %p79
      %p86 = scmp.eq.s32.totalorder %s30, 3
      %p87 = por %p85, %p86
      %p88 = scmp.ne.s32.totalorder %s80, %s83
      %p89 = scmp.eq.s32.totalorder %s30, 0
      %p90 = por %p88, %p89
      %p91 = scmp.ne.s32.totalorder %s80, %s83
      %p92 = scmp.eq.s32.totalorder %s35, 3
      %p93 = por %p91, %p92
      %p94 = scmp.ne.s32.totalorder %s83, %s84
      %p95 = scmp.eq.s32.totalorder %s35, 0
      %p96 = por %p94, %p95
      %p97 = scmp.ne.s32.totalorder %s83, %s84
      %p98 = scmp.eq.s32.totalorder %s36, 3
      %p99 = por %p97, %p98
      %p101 = scmp.ne.s32.totalorder %s84, %s100
      %p102 = scmp.eq.s32.totalorder %s36, 0
      %p103 = por %p101, %p102
      %s104 = ssub.s32 %s37, %s49
      %p105 = scmp.eq.s32.totalorder %s104, 0
      %s107 = sadd.s32 %s106, 1
      %s108 = scalar_select %p105, %s106, %s107
      %p111 = pneg %p105
      %p112 = scmp.eq.s32.totalorder %s30, 3
      %p113 = por %p111, %p112
      %p114 = scmp.ne.s32.totalorder %s106, %s109
      %p115 = scmp.eq.s32.totalorder %s30, 0
      %p116 = por %p114, %p115
      %p117 = scmp.ne.s32.totalorder %s106, %s109
      %p118 = scmp.eq.s32.totalorder %s35, 3
      %p119 = por %p117, %p118
      %p120 = scmp.ne.s32.totalorder %s109, %s110
      %p121 = scmp.eq.s32.totalorder %s35, 0
      %p122 = por %p120, %p121
      %p123 = scmp.ne.s32.totalorder %s109, %s110
      %p124 = scmp.eq.s32.totalorder %s36, 3
      %p125 = por %p123, %p124
      %p127 = scmp.ne.s32.totalorder %s110, %s126
      %p128 = scmp.eq.s32.totalorder %s36, 0
      %p129 = por %p127, %p128
      %s130 = ssub.s32 %s37, %s49
      %s131 = ssub.s32 %s38, %s45
      %s132 = sor.u32 %s130, %s131
      %p133 = scmp.eq.s32.totalorder %s132, 0
      %s135 = sadd.s32 %s134, 1
      %s136 = scalar_select %p133, %s134, %s135
      %p139 = pneg %p133
      %p140 = scmp.eq.s32.totalorder %s30, 3
      %p141 = por %p139, %p140
      %p142 = scmp.ne.s32.totalorder %s134, %s137
      %p143 = scmp.eq.s32.totalorder %s30, 0
      %p144 = por %p142, %p143
      %p145 = scmp.ne.s32.totalorder %s134, %s137
      %p146 = scmp.eq.s32.totalorder %s35, 3
      %p147 = por %p145, %p146
      %p148 = scmp.ne.s32.totalorder %s137, %s138
      %p149 = scmp.eq.s32.totalorder %s35, 0
      %p150 = por %p148, %p149
      %p151 = scmp.ne.s32.totalorder %s137, %s138
      %p152 = scmp.eq.s32.totalorder %s36, 3
      %p153 = por %p151, %p152
      %p155 = scmp.ne.s32.totalorder %s138, %s154
      %p156 = scmp.eq.s32.totalorder %s36, 0
      %p157 = por %p155, %p156
      %s158 = ssub.s32 %s37, %s49
      %s159 = ssub.s32 %s38, %s45
      %s160 = sor.u32 %s158, %s159
      %p161 = scmp.eq.s32.totalorder %s160, 0
      %s163 = sadd.s32 %s162, 1
      %s164 = scalar_select %p161, %s162, %s163
      %p167 = pneg %p161
      %p168 = scmp.eq.s32.totalorder %s30, 3
      %p169 = por %p167, %p168
      %p170 = scmp.ne.s32.totalorder %s162, %s165
      %p171 = scmp.eq.s32.totalorder %s30, 0
      %p172 = por %p170, %p171
      %p173 = scmp.ne.s32.totalorder %s162, %s165
      %p174 = scmp.eq.s32.totalorder %s35, 3
      %p175 = por %p173, %p174
      %p176 = scmp.ne.s32.totalorder %s165, %s166
      %p177 = scmp.eq.s32.totalorder %s35, 0
      %p178 = por %p176, %p177
      %p179 = scmp.ne.s32.totalorder %s165, %s166
      %p180 = scmp.eq.s32.totalorder %s36, 3
      %p181 = por %p179, %p180
      %p183 = scmp.ne.s32.totalorder %s166, %s182
      %p184 = scmp.eq.s32.totalorder %s36, 0
      %p185 = por %p183, %p184
      %p186 = scmp.le.s32.totalorder 1, %s30
      %p187 = scmp.lt.s32.totalorder %s30, 5
      %p188 = pnand %p186, %p187
      %p189 = pneg %p188
      // Predicated region
      $region9: #{tpu_custom_call.1} parent=5 // pred_check
        _
      $region10: #{tpu_custom_call.1} parent=5 // pred_check_branch
        %191 = sbr.rel (%p188) target = $region12
      $region11: #{tpu_custom_call.1} parent=5 // pred_region
        %s192 = ssub.s32 %s30, 1
      $region12: #{tpu_custom_call.1} parent=5 // pred_fallthru
        _
      %p193 = scmp.lt.s32.totalorder %s30, 4
      // Predicated region
      $region13: #{tpu_custom_call.1} parent=5 // pred_check
        %p194 = pneg %p193
      $region14: #{tpu_custom_call.1} parent=5 // pred_check_branch
        %196 = sbr.rel (%p194) target = $region16
      $region15: #{tpu_custom_call.1} parent=5 // pred_region
        // Predicated region
        $region17: #{tpu_custom_call.1} parent=15 // pred_check
          %p197 = pneg %p64
        $region18: #{tpu_custom_call.1} parent=15 // pred_check_branch
          %199 = sbr.rel (%p197) target = $region20
        $region19: #{tpu_custom_call.1} parent=15 // pred_region
          %s200 = sand.u32 %s54, 1
          %s201 = scalar_lea.sflag [#allocation6], %s200
          %s202 = sand.u32 %s54, 1
          %s203 = smul.addr %s202, 8
          %s204 = scalar_lea.vmem [#allocation5], %s203
          %s206 = ssub.s32 128, 128
          %207 = vsyncadd %s201, %s206
          %s208 = smul.addr %s37, 2
          %s209 = sadd.s32 %s38, %s208
          %s210 = smul.addr %s209, 128
          %s211 = scalar_lea.hbm %s2, %s210
          %s213 = sshll.u32 %s204, 4
          %s214 = int_to_ptr.vmem [resolvable:$true] %s213
          %216 = dma.hbm_to_vmem [thread:$0]  %s211, 128, %s214, %s201
        $region20: #{tpu_custom_call.1} parent=15 // pred_fallthru
          _
        // Predicated region
        $region21: #{tpu_custom_call.1} parent=15 // pred_check
          %p217 = pneg %p90
        $region22: #{tpu_custom_call.1} parent=15 // pred_check_branch
          %219 = sbr.rel (%p217) target = $region24
        $region23: #{tpu_custom_call.1} parent=15 // pred_region
          %s220 = sand.u32 %s30, 1
          %s221 = scalar_lea.sflag [#allocation9], %s220
          %s222 = sand.u32 %s80, 1
          %s223 = smul.addr %s222, 8
          %s224 = scalar_lea.vmem [#allocation8], %s223
          %s226 = ssub.s32 128, 128
          %227 = vsyncadd %s221, %s226
          %s228 = smul.addr %s37, 128
          %s229 = scalar_lea.hbm %s3, %s228
          %s231 = sshll.u32 %s224, 4
          %s232 = int_to_ptr.vmem [resolvable:$true] %s231
          %234 = dma.hbm_to_vmem [thread:$0]  %s229, 128, %s232, %s221
        $region24: #{tpu_custom_call.1} parent=15 // pred_fallthru
          _
        // Predicated region
        $region25: #{tpu_custom_call.1} parent=15 // pred_check
          %p235 = pneg %p116
        $region26: #{tpu_custom_call.1} parent=15 // pred_check_branch
          %237 = sbr.rel (%p235) target = $region28
        $region27: #{tpu_custom_call.1} parent=15 // pred_region
          %s238 = sand.u32 %s30, 1
          %s239 = scalar_lea.sflag [#allocation9], %s238
          %s240 = sand.u32 %s106, 1
          %s241 = smul.addr %s240, 8
          %s242 = scalar_lea.vmem [#allocation10], %s241
          %s244 = ssub.s32 128, 128
          %245 = vsyncadd %s239, %s244
          %s246 = smul.addr %s37, 128
          %s247 = scalar_lea.hbm %s4, %s246
          %s249 = sshll.u32 %s242, 4
          %s250 = int_to_ptr.vmem [resolvable:$true] %s249
          %252 = dma.hbm_to_vmem [thread:$0]  %s247, 128, %s250, %s239
        $region28: #{tpu_custom_call.1} parent=15 // pred_fallthru
          _
      $region16: #{tpu_custom_call.1} parent=5 // pred_fallthru
        _
      %p253 = scmp.le.s32.totalorder 1, %s30
      %p254 = scmp.lt.s32.totalorder %s30, 5
      %p255 = pnand %p253, %p254
      %p256 = pneg %p255
      // Predicated region
      $region29: #{tpu_custom_call.1} parent=5 // pred_check
        _
      $region30: #{tpu_custom_call.1} parent=5 // pred_check_branch
        %258 = sbr.rel (%p255) target = $region32
      $region31: #{tpu_custom_call.1} parent=5 // pred_region
        %s259 = ssub.s32 %s30, 1
        %s260 = sand.u32 %s57, 1
        %s261 = scalar_lea.sflag [#allocation6], %s260
        %s262 = sand.u32 %s57, 1
        %s263 = smul.addr %s262, 8
        %s264 = scalar_lea.vmem [#allocation5], %s263
        // Predicated region
        $region33: #{tpu_custom_call.1} parent=31 // pred_check
          %p265 = pneg %p70
        $region34: #{tpu_custom_call.1} parent=31 // pred_check_branch
          %267 = sbr.rel (%p265) target = $region36
        $region35: #{tpu_custom_call.1} parent=31 // pred_region
          %268 = dma.done %s261, 128
        $region36: #{tpu_custom_call.1} parent=31 // pred_fallthru
          _
        %s269 = sand.u32 %s35, 1
        %s270 = scalar_lea.sflag [#allocation9], %s269
        %s271 = sand.u32 %s83, 1
        %s272 = smul.addr %s271, 8
        %s273 = scalar_lea.vmem [#allocation8], %s272
        // Predicated region
        $region37: #{tpu_custom_call.1} parent=31 // pred_check
          %p274 = pneg %p96
        $region38: #{tpu_custom_call.1} parent=31 // pred_check_branch
          %276 = sbr.rel (%p274) target = $region40
        $region39: #{tpu_custom_call.1} parent=31 // pred_region
          %277 = dma.done %s270, 128
        $region40: #{tpu_custom_call.1} parent=31 // pred_fallthru
          _
        %s278 = sand.u32 %s35, 1
        %s279 = scalar_lea.sflag [#allocation9], %s278
        %s280 = sand.u32 %s109, 1
        %s281 = smul.addr %s280, 8
        %s282 = scalar_lea.vmem [#allocation10], %s281
        // Predicated region
        $region41: #{tpu_custom_call.1} parent=31 // pred_check
          %p283 = pneg %p122
        $region42: #{tpu_custom_call.1} parent=31 // pred_check_branch
          %285 = sbr.rel (%p283) target = $region44
        $region43: #{tpu_custom_call.1} parent=31 // pred_region
          %286 = dma.done %s279, 128
        $region44: #{tpu_custom_call.1} parent=31 // pred_fallthru
          _
        %s287 = sand.u32 %s57, 1
        %s288 = scalar_lea.sflag [#allocation6], %s287
        %s289 = sand.u32 %s57, 1
        %s290 = smul.addr %s289, 8
        %s291 = scalar_lea.vmem [#allocation5], %s290
        %p292 = pneg %p70
        %p293 = pneg %p67
        %s294 = sand.u32 %s35, 1
        %s295 = scalar_lea.sflag [#allocation9], %s294
        %s296 = sand.u32 %s83, 1
        %s297 = smul.addr %s296, 8
        %s298 = scalar_lea.vmem [#allocation8], %s297
        %p299 = pneg %p96
        %p300 = pneg %p93
        %s301 = sand.u32 %s35, 1
        %s302 = scalar_lea.sflag [#allocation9], %s301
        %s303 = sand.u32 %s109, 1
        %s304 = smul.addr %s303, 8
        %s305 = scalar_lea.vmem [#allocation10], %s304
        %p306 = pneg %p122
        %p307 = pneg %p119
        %p308 = pneg %p150
        %p309 = pneg %p147
        %s310 = sand.u32 %s137, 1
        %s311 = scalar_lea.sflag [#allocation7], %s310
        %s312 = sand.u32 %s137, 1
        %s313 = smul.addr %s312, 8
        %s314 = scalar_lea.vmem [#allocation11], %s313
        %p315 = pneg %p178
        %p316 = pneg %p175
        %s317 = sand.u32 %s165, 1
        %s318 = sand.u32 %s165, 1
        %s319 = smul.addr %s318, 32
        %s320 = scalar_lea.vmem [#allocation12], %s319
        %s321 = sld [smem:[#allocation4 + %s39]]
        %s322 = sld [smem:[#allocation3 + %s39]]
        %v323 = vlaneseq
        %v324 = vand.u32 %v323, 127
        %v325 = vstv %s321
        %vm326 = vcmp.lt.s32.totalorder %v324, %v325
        %v327 = vlaneseq
        %v328 = vshrl.u32 %v327, 7
        %s329 = smul.u32 %s40, 8
        %v330 = vstv %s329
        %v331 = vadd.s32 %v328, %v330
        %v332 = vstv %s322
        %vm333 = vcmp.lt.s32.totalorder %v331, %v332
        %v334 = vld [vmem:[%s264] sm:$0xff]
        %v335 = vld [vmem:[%s273] sm:$0xff]
        %v336 = vld [vmem:[%s282] sm:$0xff]
        %v337 = vmul.f32 %v334, 0.35355338
        %vm338 = vcmask 64512
        %v340 = vsel %vm338, %v337, 0
        %v343 = vsel %vm338, %v335, 0
        %345 = vmatprep.subr.mxu0 0.0
        %346 = vmatpush1.xpose.msra.mxu0 %v343
        %347 = vmatprep.subr.mxu0 0.0
        %348 = vmatpush1.xpose.msra.mxu0 0.0
        %349 = vmatprep.subr.mxu0 0.0
        %350 = vmatpush1.xpose.msra.mxu0 0.0
        %351 = vmatprep.subr.mxu0 0.0
        %352 = vmatpush1.xpose.msra.mxu0 0.0
        %353 = vmatprep.subr.mxu0 0.0
        %354 = vmatpush1.xpose.msra.mxu0 0.0
        %355 = vmatprep.subr.mxu0 0.0
        %356 = vmatpush1.xpose.msra.mxu0 0.0
        %357 = vmatprep.subr.mxu0 0.0
        %358 = vmatpush1.xpose.msra.mxu0 0.0
        %359 = vmatprep.subr.mxu0 0.0
        %360 = vmatpush1.xpose.msra.mxu0 0.0
        %361 = vmatprep.subr.mxu0 0.0
        %362 = vmatpush1.xpose.msra.mxu0 0.0
        %363 = vmatprep.subr.mxu0 0.0
        %364 = vmatpush1.xpose.msra.mxu0 0.0
        %365 = vmatprep.subr.mxu0 0.0
        %366 = vmatpush1.xpose.msra.mxu0 0.0
        %367 = vmatprep.subr.mxu0 0.0
        %368 = vmatpush1.xpose.msra.mxu0 0.0
        %369 = vmatprep.subr.mxu0 0.0
        %370 = vmatpush1.xpose.msra.mxu0 0.0
        %371 = vmatprep.subr.mxu0 0.0
        %372 = vmatpush1.xpose.msra.mxu0 0.0
        %373 = vmatprep.subr.mxu0 0.0
        %374 = vmatpush1.xpose.msra.mxu0 0.0
        %375 = vmatprep.subr.mxu0 0.0
        %376 = vmatpush1.xpose.msra.mxu0 0.0
        %377 = vmatprep.subr.mxu0 0.0
        %378 = vmatpush1.xpose.msra.mxu0 0.0
        %379 = vmatprep.subr.mxu0 0.0
        %380 = vmatpush1.xpose.msra.mxu0 0.0
        %381 = vmatprep.subr.mxu0 0.0
        %382 = vmatpush1.xpose.msra.mxu0 0.0
        %383 = vmatprep.subr.mxu0 0.0
        %384 = vmatpush1.xpose.msra.mxu0 0.0
        %385 = vmatprep.subr.mxu0 0.0
        %386 = vmatpush1.xpose.msra.mxu0 0.0
        %387 = vmatprep.subr.mxu0 0.0
        %388 = vmatpush1.xpose.msra.mxu0 0.0
        %389 = vmatprep.subr.mxu0 0.0
        %390 = vmatpush1.xpose.msra.mxu0 0.0
        %391 = vmatprep.subr.mxu0 0.0
        %392 = vmatpush1.xpose.msra.mxu0 0.0
        %393 = vmatprep.subr.mxu0 0.0
        %394 = vmatpush1.xpose.msra.mxu0 0.0
        %395 = vmatprep.subr.mxu0 0.0
        %396 = vmatpush1.xpose.msra.mxu0 0.0
        %397 = vmatprep.subr.mxu0 0.0
        %398 = vmatpush1.xpose.msra.mxu0 0.0
        %399 = vmatprep.subr.mxu0 0.0
        %400 = vmatpush1.xpose.msra.mxu0 0.0
        %401 = vmatprep.subr.mxu0 0.0
        %402 = vmatpush1.xpose.msra.mxu0 0.0
        %403 = vmatprep.subr.mxu0 0.0
        %404 = vmatpush1.xpose.msra.mxu0 0.0
        %405 = vmatprep.subr.mxu0 0.0
        %406 = vmatpush1.xpose.msra.mxu0 0.0
        %407 = vmatprep.subr.mxu0 0.0
        %408 = vmatpush1.xpose.msra.mxu0 0.0
        %409 = vmatprep.mubr.f32.mxu0 0.0
        %410 = vmatmul.mubr.f32.gmra.mrb[0].mxu0 %v340
        %v411 = vpop.f32.mrb[0].mxu0
        %v412 = vadd.f32 0.0, %v411
        %v413 = vpop.f32.mrb[0].mxu0
        %414 = vdwg.mxu0
        %v415 = vsel %vm326, 1, 0
        %vm416 = vcmp.eq.s32.totalorder %v415, 1
        %v417 = vsel %vm416, %v412, -1e+09
        %v418 = vsel %vm338, %v417, -inf
        %419 = vmax.xlane.f32.xlu0 %v418
        %v420 = vpop.xlane.xlu0 %419
        %v421 = vsub.f32 %v417, %v420
        %v422 = vmul.f32 %v421, 1.442695
        %v423 = vpow.pop %v422
        %v424 = vsel %vm338, %v423, 0.0
        %425 = vadd.xlane.f32.xlu0 %v424
        %v426 = vpop.xlane.xlu0 %425
        %v427 = vrcp.pop %v426
        %v428 = vmul.f32 1.0, %v427
        %v429 = vmul.f32 %v423, %v428
        %430 = vst.msk [vmem:[%s320] sm:$0xff] %vm338, %v429
        %v432 = vsel %vm338, %v429, 0
        %434 = vmatprep.subr.mxu0 0.0
        %435 = vmatpush1.msra.mxu0 %v336
        %436 = vmatprep.subr.mxu0 0.0
        %437 = vmatpush1.msra.mxu0 0.0
        %438 = vmatprep.subr.mxu0 0.0
        %439 = vmatpush1.msra.mxu0 0.0
        %440 = vmatprep.subr.mxu0 0.0
        %441 = vmatpush1.msra.mxu0 0.0
        %442 = vmatprep.subr.mxu0 0.0
        %443 = vmatpush1.msra.mxu0 0.0
        %444 = vmatprep.subr.mxu0 0.0
        %445 = vmatpush1.msra.mxu0 0.0
        %446 = vmatprep.subr.mxu0 0.0
        %447 = vmatpush1.msra.mxu0 0.0
        %448 = vmatprep.subr.mxu0 0.0
        %449 = vmatpush1.msra.mxu0 0.0
        %450 = vmatprep.subr.mxu0 0.0
        %451 = vmatpush1.msra.mxu0 0.0
        %452 = vmatprep.subr.mxu0 0.0
        %453 = vmatpush1.msra.mxu0 0.0
        %454 = vmatprep.subr.mxu0 0.0
        %455 = vmatpush1.msra.mxu0 0.0
        %456 = vmatprep.subr.mxu0 0.0
        %457 = vmatpush1.msra.mxu0 0.0
        %458 = vmatprep.subr.mxu0 0.0
        %459 = vmatpush1.msra.mxu0 0.0
        %460 = vmatprep.subr.mxu0 0.0
        %461 = vmatpush1.msra.mxu0 0.0
        %462 = vmatprep.subr.mxu0 0.0
        %463 = vmatpush1.msra.mxu0 0.0
        %464 = vmatprep.subr.mxu0 0.0
        %465 = vmatpush1.msra.mxu0 0.0
        %466 = vmatprep.subr.mxu0 0.0
        %467 = vmatpush1.msra.mxu0 0.0
        %468 = vmatprep.subr.mxu0 0.0
        %469 = vmatpush1.msra.mxu0 0.0
        %470 = vmatprep.subr.mxu0 0.0
        %471 = vmatpush1.msra.mxu0 0.0
        %472 = vmatprep.subr.mxu0 0.0
        %473 = vmatpush1.msra.mxu0 0.0
        %474 = vmatprep.subr.mxu0 0.0
        %475 = vmatpush1.msra.mxu0 0.0
        %476 = vmatprep.subr.mxu0 0.0
        %477 = vmatpush1.msra.mxu0 0.0
        %478 = vmatprep.subr.mxu0 0.0
        %479 = vmatpush1.msra.mxu0 0.0
        %480 = vmatprep.subr.mxu0 0.0
        %481 = vmatpush1.msra.mxu0 0.0
        %482 = vmatprep.subr.mxu0 0.0
        %483 = vmatpush1.msra.mxu0 0.0
        %484 = vmatprep.subr.mxu0 0.0
        %485 = vmatpush1.msra.mxu0 0.0
        %486 = vmatprep.subr.mxu0 0.0
        %487 = vmatpush1.msra.mxu0 0.0
        %488 = vmatprep.subr.mxu0 0.0
        %489 = vmatpush1.msra.mxu0 0.0
        %490 = vmatprep.subr.mxu0 0.0
        %491 = vmatpush1.msra.mxu0 0.0
        %492 = vmatprep.subr.mxu0 0.0
        %493 = vmatpush1.msra.mxu0 0.0
        %494 = vmatprep.subr.mxu0 0.0
        %495 = vmatpush1.msra.mxu0 0.0
        %496 = vmatprep.subr.mxu0 0.0
        %497 = vmatpush1.msra.mxu0 0.0
        %498 = vmatprep.mubr.f32.mxu0 0.0
        %499 = vmatmul.mubr.f32.gmra.mrb[0].mxu0 %v432
        %v500 = vpop.f32.mrb[0].mxu0
        %v501 = vadd.f32 0.0, %v500
        %v502 = vpop.f32.mrb[0].mxu0
        %503 = vdwg.mxu0
        %v504 = vsel %vm333, 1, 0
        %vm505 = vcmp.eq.s32.totalorder %v504, 1
        %v506 = vsel %vm505, %v501, 0.0
        %507 = vst.msk [vmem:[%s314] sm:$0xff] %vm338, %v506
        %v508 = vld [vmem:[%s264] sm:$0xff]
        %v509 = vld [vmem:[%s273] sm:$0xff]
        %v510 = vld [vmem:[%s282] sm:$0xff]
        %v511 = vmul.f32 %v508, 0.35355338
        %513 = vrot.lane.b32.xlu0 %v511, 120
        %v514 = vpop.permute.xlu0 %513
        %516 = vrot.lane.b32.xlu0 %v509, 120
        %v517 = vpop.permute.xlu0 %516
        %v518 = vsel %vm338, %v514, 0
        %v520 = vsel %vm338, %v517, 0
        %522 = vmatprep.subr.mxu0 0.0
        %523 = vmatpush1.xpose.msra.mxu0 %v520
        %524 = vmatprep.subr.mxu0 0.0
        %525 = vmatpush1.xpose.msra.mxu0 0.0
        %526 = vmatprep.subr.mxu0 0.0
        %527 = vmatpush1.xpose.msra.mxu0 0.0
        %528 = vmatprep.subr.mxu0 0.0
        %529 = vmatpush1.xpose.msra.mxu0 0.0
        %530 = vmatprep.subr.mxu0 0.0
        %531 = vmatpush1.xpose.msra.mxu0 0.0
        %532 = vmatprep.subr.mxu0 0.0
        %533 = vmatpush1.xpose.msra.mxu0 0.0
        %534 = vmatprep.subr.mxu0 0.0
        %535 = vmatpush1.xpose.msra.mxu0 0.0
        %536 = vmatprep.subr.mxu0 0.0
        %537 = vmatpush1.xpose.msra.mxu0 0.0
        %538 = vmatprep.subr.mxu0 0.0
        %539 = vmatpush1.xpose.msra.mxu0 0.0
        %540 = vmatprep.subr.mxu0 0.0
        %541 = vmatpush1.xpose.msra.mxu0 0.0
        %542 = vmatprep.subr.mxu0 0.0
        %543 = vmatpush1.xpose.msra.mxu0 0.0
        %544 = vmatprep.subr.mxu0 0.0
        %545 = vmatpush1.xpose.msra.mxu0 0.0
        %546 = vmatprep.subr.mxu0 0.0
        %547 = vmatpush1.xpose.msra.mxu0 0.0
        %548 = vmatprep.subr.mxu0 0.0
        %549 = vmatpush1.xpose.msra.mxu0 0.0
        %550 = vmatprep.subr.mxu0 0.0
        %551 = vmatpush1.xpose.msra.mxu0 0.0
        %552 = vmatprep.subr.mxu0 0.0
        %553 = vmatpush1.xpose.msra.mxu0 0.0
        %554 = vmatprep.subr.mxu0 0.0
        %555 = vmatpush1.xpose.msra.mxu0 0.0
        %556 = vmatprep.subr.mxu0 0.0
        %557 = vmatpush1.xpose.msra.mxu0 0.0
        %558 = vmatprep.subr.mxu0 0.0
        %559 = vmatpush1.xpose.msra.mxu0 0.0
        %560 = vmatprep.subr.mxu0 0.0
        %561 = vmatpush1.xpose.msra.mxu0 0.0
        %562 = vmatprep.subr.mxu0 0.0
        %563 = vmatpush1.xpose.msra.mxu0 0.0
        %564 = vmatprep.subr.mxu0 0.0
        %565 = vmatpush1.xpose.msra.mxu0 0.0
        %566 = vmatprep.subr.mxu0 0.0
        %567 = vmatpush1.xpose.msra.mxu0 0.0
        %568 = vmatprep.subr.mxu0 0.0
        %569 = vmatpush1.xpose.msra.mxu0 0.0
        %570 = vmatprep.subr.mxu0 0.0
        %571 = vmatpush1.xpose.msra.mxu0 0.0
        %572 = vmatprep.subr.mxu0 0.0
        %573 = vmatpush1.xpose.msra.mxu0 0.0
        %574 = vmatprep.subr.mxu0 0.0
        %575 = vmatpush1.xpose.msra.mxu0 0.0
        %576 = vmatprep.subr.mxu0 0.0
        %577 = vmatpush1.xpose.msra.mxu0 0.0
        %578 = vmatprep.subr.mxu0 0.0
        %579 = vmatpush1.xpose.msra.mxu0 0.0
        %580 = vmatprep.subr.mxu0 0.0
        %581 = vmatpush1.xpose.msra.mxu0 0.0
        %582 = vmatprep.subr.mxu0 0.0
        %583 = vmatpush1.xpose.msra.mxu0 0.0
        %584 = vmatprep.subr.mxu0 0.0
        %585 = vmatpush1.xpose.msra.mxu0 0.0
        %586 = vmatprep.mubr.f32.mxu0 0.0
        %587 = vmatmul.mubr.f32.gmra.mrb[0].mxu0 %v518
        %v588 = vpop.f32.mrb[0].mxu0
        %v589 = vadd.f32 0.0, %v588
        %v590 = vpop.f32.mrb[0].mxu0
        %591 = vdwg.mxu0
        %v592 = vsel %vm416, %v589, -1e+09
        %v593 = vsel %vm338, %v592, -inf
        %594 = vmax.xlane.f32.xlu0 %v593
        %v595 = vpop.xlane.xlu0 %594
        %v596 = vsub.f32 %v592, %v595
        %v597 = vmul.f32 %v596, 1.442695
        %v598 = vpow.pop %v597
        %v599 = vsel %vm338, %v598, 0.0
        %600 = vadd.xlane.f32.xlu0 %v599
        %v601 = vpop.xlane.xlu0 %600
        %v602 = vrcp.pop %v601
        %v603 = vmul.f32 1.0, %v602
        %v604 = vmul.f32 %v598, %v603
        %s605 = scalar_lea.vmem %s320, 8 [#allocation12]
        %606 = vst.msk [vmem:[%s605] sm:$0xff] %vm338, %v604
        %608 = vrot.lane.b32.xlu0 %v510, 120
        %v609 = vpop.permute.xlu0 %608
        %v612 = vsel %vm338, %v604, 0
        %614 = vmatprep.subr.mxu0 0.0
        %615 = vmatpush1.msra.mxu0 %v609
        %616 = vmatprep.subr.mxu0 0.0
        %617 = vmatpush1.msra.mxu0 0.0
        %618 = vmatprep.subr.mxu0 0.0
        %619 = vmatpush1.msra.mxu0 0.0
        %620 = vmatprep.subr.mxu0 0.0
        %621 = vmatpush1.msra.mxu0 0.0
        %622 = vmatprep.subr.mxu0 0.0
        %623 = vmatpush1.msra.mxu0 0.0
        %624 = vmatprep.subr.mxu0 0.0
        %625 = vmatpush1.msra.mxu0 0.0
        %626 = vmatprep.subr.mxu0 0.0
        %627 = vmatpush1.msra.mxu0 0.0
        %628 = vmatprep.subr.mxu0 0.0
        %629 = vmatpush1.msra.mxu0 0.0
        %630 = vmatprep.subr.mxu0 0.0
        %631 = vmatpush1.msra.mxu0 0.0
        %632 = vmatprep.subr.mxu0 0.0
        %633 = vmatpush1.msra.mxu0 0.0
        %634 = vmatprep.subr.mxu0 0.0
        %635 = vmatpush1.msra.mxu0 0.0
        %636 = vmatprep.subr.mxu0 0.0
        %637 = vmatpush1.msra.mxu0 0.0
        %638 = vmatprep.subr.mxu0 0.0
        %639 = vmatpush1.msra.mxu0 0.0
        %640 = vmatprep.subr.mxu0 0.0
        %641 = vmatpush1.msra.mxu0 0.0
        %642 = vmatprep.subr.mxu0 0.0
        %643 = vmatpush1.msra.mxu0 0.0
        %644 = vmatprep.subr.mxu0 0.0
        %645 = vmatpush1.msra.mxu0 0.0
        %646 = vmatprep.subr.mxu0 0.0
        %647 = vmatpush1.msra.mxu0 0.0
        %648 = vmatprep.subr.mxu0 0.0
        %649 = vmatpush1.msra.mxu0 0.0
        %650 = vmatprep.subr.mxu0 0.0
        %651 = vmatpush1.msra.mxu0 0.0
        %652 = vmatprep.subr.mxu0 0.0
        %653 = vmatpush1.msra.mxu0 0.0
        %654 = vmatprep.subr.mxu0 0.0
        %655 = vmatpush1.msra.mxu0 0.0
        %656 = vmatprep.subr.mxu0 0.0
        %657 = vmatpush1.msra.mxu0 0.0
        %658 = vmatprep.subr.mxu0 0.0
        %659 = vmatpush1.msra.mxu0 0.0
        %660 = vmatprep.subr.mxu0 0.0
        %661 = vmatpush1.msra.mxu0 0.0
        %662 = vmatprep.subr.mxu0 0.0
        %663 = vmatpush1.msra.mxu0 0.0
        %664 = vmatprep.subr.mxu0 0.0
        %665 = vmatpush1.msra.mxu0 0.0
        %666 = vmatprep.subr.mxu0 0.0
        %667 = vmatpush1.msra.mxu0 0.0
        %668 = vmatprep.subr.mxu0 0.0
        %669 = vmatpush1.msra.mxu0 0.0
        %670 = vmatprep.subr.mxu0 0.0
        %671 = vmatpush1.msra.mxu0 0.0
        %672 = vmatprep.subr.mxu0 0.0
        %673 = vmatpush1.msra.mxu0 0.0
        %674 = vmatprep.subr.mxu0 0.0
        %675 = vmatpush1.msra.mxu0 0.0
        %676 = vmatprep.subr.mxu0 0.0
        %677 = vmatpush1.msra.mxu0 0.0
        %678 = vmatprep.mubr.f32.mxu0 0.0
        %679 = vmatmul.mubr.f32.gmra.mrb[0].mxu0 %v612
        %v680 = vpop.f32.mrb[0].mxu0
        %v681 = vadd.f32 0.0, %v680
        %v682 = vpop.f32.mrb[0].mxu0
        %683 = vdwg.mxu0
        %v684 = vsel %vm505, %v681, 0.0
        %686 = vrot.lane.b32.xlu0 %v684, 8
        %v687 = vpop.permute.xlu0 %686
        %vm689 = vcmask 130112
        %690 = vst.msk [vmem:[%s314] sm:$0xff] %vm689, %v687
        %v691 = vld [vmem:[%s264] sm:$0xff]
        %v692 = vld [vmem:[%s273] sm:$0xff]
        %v693 = vld [vmem:[%s282] sm:$0xff]
        %v694 = vmul.f32 %v691, 0.35355338
        %696 = vrot.lane.b32.xlu0 %v694, 112
        %v697 = vpop.permute.xlu0 %696
        %699 = vrot.lane.b32.xlu0 %v692, 112
        %v700 = vpop.permute.xlu0 %699
        %v701 = vsel %vm338, %v697, 0
        %v703 = vsel %vm338, %v700, 0
        %705 = vmatprep.subr.mxu0 0.0
        %706 = vmatpush1.xpose.msra.mxu0 %v703
        %707 = vmatprep.subr.mxu0 0.0
        %708 = vmatpush1.xpose.msra.mxu0 0.0
        %709 = vmatprep.subr.mxu0 0.0
        %710 = vmatpush1.xpose.msra.mxu0 0.0
        %711 = vmatprep.subr.mxu0 0.0
        %712 = vmatpush1.xpose.msra.mxu0 0.0
        %713 = vmatprep.subr.mxu0 0.0
        %714 = vmatpush1.xpose.msra.mxu0 0.0
        %715 = vmatprep.subr.mxu0 0.0
        %716 = vmatpush1.xpose.msra.mxu0 0.0
        %717 = vmatprep.subr.mxu0 0.0
        %718 = vmatpush1.xpose.msra.mxu0 0.0
        %719 = vmatprep.subr.mxu0 0.0
        %720 = vmatpush1.xpose.msra.mxu0 0.0
        %721 = vmatprep.subr.mxu0 0.0
        %722 = vmatpush1.xpose.msra.mxu0 0.0
        %723 = vmatprep.subr.mxu0 0.0
        %724 = vmatpush1.xpose.msra.mxu0 0.0
        %725 = vmatprep.subr.mxu0 0.0
        %726 = vmatpush1.xpose.msra.mxu0 0.0
        %727 = vmatprep.subr.mxu0 0.0
        %728 = vmatpush1.xpose.msra.mxu0 0.0
        %729 = vmatprep.subr.mxu0 0.0
        %730 = vmatpush1.xpose.msra.mxu0 0.0
        %731 = vmatprep.subr.mxu0 0.0
        %732 = vmatpush1.xpose.msra.mxu0 0.0
        %733 = vmatprep.subr.mxu0 0.0
        %734 = vmatpush1.xpose.msra.mxu0 0.0
        %735 = vmatprep.subr.mxu0 0.0
        %736 = vmatpush1.xpose.msra.mxu0 0.0
        %737 = vmatprep.subr.mxu0 0.0
        %738 = vmatpush1.xpose.msra.mxu0 0.0
        %739 = vmatprep.subr.mxu0 0.0
        %740 = vmatpush1.xpose.msra.mxu0 0.0
        %741 = vmatprep.subr.mxu0 0.0
        %742 = vmatpush1.xpose.msra.mxu0 0.0
        %743 = vmatprep.subr.mxu0 0.0
        %744 = vmatpush1.xpose.msra.mxu0 0.0
        %745 = vmatprep.subr.mxu0 0.0
        %746 = vmatpush1.xpose.msra.mxu0 0.0
        %747 = vmatprep.subr.mxu0 0.0
        %748 = vmatpush1.xpose.msra.mxu0 0.0
        %749 = vmatprep.subr.mxu0 0.0
        %750 = vmatpush1.xpose.msra.mxu0 0.0
        %751 = vmatprep.subr.mxu0 0.0
        %752 = vmatpush1.xpose.msra.mxu0 0.0
        %753 = vmatprep.subr.mxu0 0.0
        %754 = vmatpush1.xpose.msra.mxu0 0.0
        %755 = vmatprep.subr.mxu0 0.0
        %756 = vmatpush1.xpose.msra.mxu0 0.0
        %757 = vmatprep.subr.mxu0 0.0
        %758 = vmatpush1.xpose.msra.mxu0 0.0
        %759 = vmatprep.subr.mxu0 0.0
        %760 = vmatpush1.xpose.msra.mxu0 0.0
        %761 = vmatprep.subr.mxu0 0.0
        %762 = vmatpush1.xpose.msra.mxu0 0.0
        %763 = vmatprep.subr.mxu0 0.0
        %764 = vmatpush1.xpose.msra.mxu0 0.0
        %765 = vmatprep.subr.mxu0 0.0
        %766 = vmatpush1.xpose.msra.mxu0 0.0
        %767 = vmatprep.subr.mxu0 0.0
        %768 = vmatpush1.xpose.msra.mxu0 0.0
        %769 = vmatprep.mubr.f32.mxu0 0.0
        %770 = vmatmul.mubr.f32.gmra.mrb[0].mxu0 %v701
        %v771 = vpop.f32.mrb[0].mxu0
        %v772 = vadd.f32 0.0, %v771
        %v773 = vpop.f32.mrb[0].mxu0
        %774 = vdwg.mxu0
        %v775 = vsel %vm416, %v772, -1e+09
        %v776 = vsel %vm338, %v775, -inf
        %777 = vmax.xlane.f32.xlu0 %v776
        %v778 = vpop.xlane.xlu0 %777
        %v779 = vsub.f32 %v775, %v778
        %v780 = vmul.f32 %v779, 1.442695
        %v781 = vpow.pop %v780
        %v782 = vsel %vm338, %v781, 0.0
        %783 = vadd.xlane.f32.xlu0 %v782
        %v784 = vpop.xlane.xlu0 %783
        %v785 = vrcp.pop %v784
        %v786 = vmul.f32 1.0, %v785
        %v787 = vmul.f32 %v781, %v786
        %s788 = scalar_lea.vmem %s320, 16 [#allocation12]
        %789 = vst.msk [vmem:[%s788] sm:$0xff] %vm338, %v787
        %791 = vrot.lane.b32.xlu0 %v693, 112
        %v792 = vpop.permute.xlu0 %791
        %v795 = vsel %vm338, %v787, 0
        %797 = vmatprep.subr.mxu0 0.0
        %798 = vmatpush1.msra.mxu0 %v792
        %799 = vmatprep.subr.mxu0 0.0
        %800 = vmatpush1.msra.mxu0 0.0
        %801 = vmatprep.subr.mxu0 0.0
        %802 = vmatpush1.msra.mxu0 0.0
        %803 = vmatprep.subr.mxu0 0.0
        %804 = vmatpush1.msra.mxu0 0.0
        %805 = vmatprep.subr.mxu0 0.0
        %806 = vmatpush1.msra.mxu0 0.0
        %807 = vmatprep.subr.mxu0 0.0
        %808 = vmatpush1.msra.mxu0 0.0
        %809 = vmatprep.subr.mxu0 0.0
        %810 = vmatpush1.msra.mxu0 0.0
        %811 = vmatprep.subr.mxu0 0.0
        %812 = vmatpush1.msra.mxu0 0.0
        %813 = vmatprep.subr.mxu0 0.0
        %814 = vmatpush1.msra.mxu0 0.0
        %815 = vmatprep.subr.mxu0 0.0
        %816 = vmatpush1.msra.mxu0 0.0
        %817 = vmatprep.subr.mxu0 0.0
        %818 = vmatpush1.msra.mxu0 0.0
        %819 = vmatprep.subr.mxu0 0.0
        %820 = vmatpush1.msra.mxu0 0.0
        %821 = vmatprep.subr.mxu0 0.0
        %822 = vmatpush1.msra.mxu0 0.0
        %823 = vmatprep.subr.mxu0 0.0
        %824 = vmatpush1.msra.mxu0 0.0
        %825 = vmatprep.subr.mxu0 0.0
        %826 = vmatpush1.msra.mxu0 0.0
        %827 = vmatprep.subr.mxu0 0.0
        %828 = vmatpush1.msra.mxu0 0.0
        %829 = vmatprep.subr.mxu0 0.0
        %830 = vmatpush1.msra.mxu0 0.0
        %831 = vmatprep.subr.mxu0 0.0
        %832 = vmatpush1.msra.mxu0 0.0
        %833 = vmatprep.subr.mxu0 0.0
        %834 = vmatpush1.msra.mxu0 0.0
        %835 = vmatprep.subr.mxu0 0.0
        %836 = vmatpush1.msra.mxu0 0.0
        %837 = vmatprep.subr.mxu0 0.0
        %838 = vmatpush1.msra.mxu0 0.0
        %839 = vmatprep.subr.mxu0 0.0
        %840 = vmatpush1.msra.mxu0 0.0
        %841 = vmatprep.subr.mxu0 0.0
        %842 = vmatpush1.msra.mxu0 0.0
        %843 = vmatprep.subr.mxu0 0.0
        %844 = vmatpush1.msra.mxu0 0.0
        %845 = vmatprep.subr.mxu0 0.0
        %846 = vmatpush1.msra.mxu0 0.0
        %847 = vmatprep.subr.mxu0 0.0
        %848 = vmatpush1.msra.mxu0 0.0
        %849 = vmatprep.subr.mxu0 0.0
        %850 = vmatpush1.msra.mxu0 0.0
        %851 = vmatprep.subr.mxu0 0.0
        %852 = vmatpush1.msra.mxu0 0.0
        %853 = vmatprep.subr.mxu0 0.0
        %854 = vmatpush1.msra.mxu0 0.0
        %855 = vmatprep.subr.mxu0 0.0
        %856 = vmatpush1.msra.mxu0 0.0
        %857 = vmatprep.subr.mxu0 0.0
        %858 = vmatpush1.msra.mxu0 0.0
        %859 = vmatprep.subr.mxu0 0.0
        %860 = vmatpush1.msra.mxu0 0.0
        %861 = vmatprep.mubr.f32.mxu0 0.0
        %862 = vmatmul.mubr.f32.gmra.mrb[0].mxu0 %v795
        %v863 = vpop.f32.mrb[0].mxu0
        %v864 = vadd.f32 0.0, %v863
        %v865 = vpop.f32.mrb[0].mxu0
        %866 = vdwg.mxu0
        %v867 = vsel %vm505, %v864, 0.0
        %869 = vrot.lane.b32.xlu0 %v867, 16
        %v870 = vpop.permute.xlu0 %869
        %vm872 = vcmask 195712
        %873 = vst.msk [vmem:[%s314] sm:$0xff] %vm872, %v870
        %v874 = vld [vmem:[%s264] sm:$0xff]
        %v875 = vld [vmem:[%s273] sm:$0xff]
        %v876 = vld [vmem:[%s282] sm:$0xff]
        %v877 = vmul.f32 %v874, 0.35355338
        %879 = vrot.lane.b32.xlu0 %v877, 104
        %v880 = vpop.permute.xlu0 %879
        %882 = vrot.lane.b32.xlu0 %v875, 104
        %v883 = vpop.permute.xlu0 %882
        %v884 = vsel %vm338, %v880, 0
        %v886 = vsel %vm338, %v883, 0
        %888 = vmatprep.subr.mxu0 0.0
        %889 = vmatpush1.xpose.msra.mxu0 %v886
        %890 = vmatprep.subr.mxu0 0.0
        %891 = vmatpush1.xpose.msra.mxu0 0.0
        %892 = vmatprep.subr.mxu0 0.0
        %893 = vmatpush1.xpose.msra.mxu0 0.0
        %894 = vmatprep.subr.mxu0 0.0
        %895 = vmatpush1.xpose.msra.mxu0 0.0
        %896 = vmatprep.subr.mxu0 0.0
        %897 = vmatpush1.xpose.msra.mxu0 0.0
        %898 = vmatprep.subr.mxu0 0.0
        %899 = vmatpush1.xpose.msra.mxu0 0.0
        %900 = vmatprep.subr.mxu0 0.0
        %901 = vmatpush1.xpose.msra.mxu0 0.0
        %902 = vmatprep.subr.mxu0 0.0
        %903 = vmatpush1.xpose.msra.mxu0 0.0
        %904 = vmatprep.subr.mxu0 0.0
        %905 = vmatpush1.xpose.msra.mxu0 0.0
        %906 = vmatprep.subr.mxu0 0.0
        %907 = vmatpush1.xpose.msra.mxu0 0.0
        %908 = vmatprep.subr.mxu0 0.0
        %909 = vmatpush1.xpose.msra.mxu0 0.0
        %910 = vmatprep.subr.mxu0 0.0
        %911 = vmatpush1.xpose.msra.mxu0 0.0
        %912 = vmatprep.subr.mxu0 0.0
        %913 = vmatpush1.xpose.msra.mxu0 0.0
        %914 = vmatprep.subr.mxu0 0.0
        %915 = vmatpush1.xpose.msra.mxu0 0.0
        %916 = vmatprep.subr.mxu0 0.0
        %917 = vmatpush1.xpose.msra.mxu0 0.0
        %918 = vmatprep.subr.mxu0 0.0
        %919 = vmatpush1.xpose.msra.mxu0 0.0
        %920 = vmatprep.subr.mxu0 0.0
        %921 = vmatpush1.xpose.msra.mxu0 0.0
        %922 = vmatprep.subr.mxu0 0.0
        %923 = vmatpush1.xpose.msra.mxu0 0.0
        %924 = vmatprep.subr.mxu0 0.0
        %925 = vmatpush1.xpose.msra.mxu0 0.0
        %926 = vmatprep.subr.mxu0 0.0
        %927 = vmatpush1.xpose.msra.mxu0 0.0
        %928 = vmatprep.subr.mxu0 0.0
        %929 = vmatpush1.xpose.msra.mxu0 0.0
        %930 = vmatprep.subr.mxu0 0.0
        %931 = vmatpush1.xpose.msra.mxu0 0.0
        %932 = vmatprep.subr.mxu0 0.0
        %933 = vmatpush1.xpose.msra.mxu0 0.0
        %934 = vmatprep.subr.mxu0 0.0
        %935 = vmatpush1.xpose.msra.mxu0 0.0
        %936 = vmatprep.subr.mxu0 0.0
        %937 = vmatpush1.xpose.msra.mxu0 0.0
        %938 = vmatprep.subr.mxu0 0.0
        %939 = vmatpush1.xpose.msra.mxu0 0.0
        %940 = vmatprep.subr.mxu0 0.0
        %941 = vmatpush1.xpose.msra.mxu0 0.0
        %942 = vmatprep.subr.mxu0 0.0
        %943 = vmatpush1.xpose.msra.mxu0 0.0
        %944 = vmatprep.subr.mxu0 0.0
        %945 = vmatpush1.xpose.msra.mxu0 0.0
        %946 = vmatprep.subr.mxu0 0.0
        %947 = vmatpush1.xpose.msra.mxu0 0.0
        %948 = vmatprep.subr.mxu0 0.0
        %949 = vmatpush1.xpose.msra.mxu0 0.0
        %950 = vmatprep.subr.mxu0 0.0
        %951 = vmatpush1.xpose.msra.mxu0 0.0
        %952 = vmatprep.mubr.f32.mxu0 0.0
        %953 = vmatmul.mubr.f32.gmra.mrb[0].mxu0 %v884
        %v954 = vpop.f32.mrb[0].mxu0
        %v955 = vadd.f32 0.0, %v954
        %v956 = vpop.f32.mrb[0].mxu0
        %957 = vdwg.mxu0
        %v958 = vsel %vm416, %v955, -1e+09
        %v959 = vsel %vm338, %v958, -inf
        %960 = vmax.xlane.f32.xlu0 %v959
        %v961 = vpop.xlane.xlu0 %960
        %v962 = vsub.f32 %v958, %v961
        %v963 = vmul.f32 %v962, 1.442695
        %v964 = vpow.pop %v963
        %v965 = vsel %vm338, %v964, 0.0
        %966 = vadd.xlane.f32.xlu0 %v965
        %v967 = vpop.xlane.xlu0 %966
        %v968 = vrcp.pop %v967
        %v969 = vmul.f32 1.0, %v968
        %v970 = vmul.f32 %v964, %v969
        %s971 = scalar_lea.vmem %s320, 24 [#allocation12]
        %972 = vst.msk [vmem:[%s971] sm:$0xff] %vm338, %v970
        %974 = vrot.lane.b32.xlu0 %v876, 104
        %v975 = vpop.permute.xlu0 %974
        %v978 = vsel %vm338, %v970, 0
        %980 = vmatprep.subr.mxu0 0.0
        %981 = vmatpush1.msra.mxu0 %v975
        %982 = vmatprep.subr.mxu0 0.0
        %983 = vmatpush1.msra.mxu0 0.0
        %984 = vmatprep.subr.mxu0 0.0
        %985 = vmatpush1.msra.mxu0 0.0
        %986 = vmatprep.subr.mxu0 0.0
        %987 = vmatpush1.msra.mxu0 0.0
        %988 = vmatprep.subr.mxu0 0.0
        %989 = vmatpush1.msra.mxu0 0.0
        %990 = vmatprep.subr.mxu0 0.0
        %991 = vmatpush1.msra.mxu0 0.0
        %992 = vmatprep.subr.mxu0 0.0
        %993 = vmatpush1.msra.mxu0 0.0
        %994 = vmatprep.subr.mxu0 0.0
        %995 = vmatpush1.msra.mxu0 0.0
        %996 = vmatprep.subr.mxu0 0.0
        %997 = vmatpush1.msra.mxu0 0.0
        %998 = vmatprep.subr.mxu0 0.0
        %999 = vmatpush1.msra.mxu0 0.0
        %1000 = vmatprep.subr.mxu0 0.0
        %1001 = vmatpush1.msra.mxu0 0.0
        %1002 = vmatprep.subr.mxu0 0.0
        %1003 = vmatpush1.msra.mxu0 0.0
        %1004 = vmatprep.subr.mxu0 0.0
        %1005 = vmatpush1.msra.mxu0 0.0
        %1006 = vmatprep.subr.mxu0 0.0
        %1007 = vmatpush1.msra.mxu0 0.0
        %1008 = vmatprep.subr.mxu0 0.0
        %1009 = vmatpush1.msra.mxu0 0.0
        %1010 = vmatprep.subr.mxu0 0.0
        %1011 = vmatpush1.msra.mxu0 0.0
        %1012 = vmatprep.subr.mxu0 0.0
        %1013 = vmatpush1.msra.mxu0 0.0
        %1014 = vmatprep.subr.mxu0 0.0
        %1015 = vmatpush1.msra.mxu0 0.0
        %1016 = vmatprep.subr.mxu0 0.0
        %1017 = vmatpush1.msra.mxu0 0.0
        %1018 = vmatprep.subr.mxu0 0.0
        %1019 = vmatpush1.msra.mxu0 0.0
        %1020 = vmatprep.subr.mxu0 0.0
        %1021 = vmatpush1.msra.mxu0 0.0
        %1022 = vmatprep.subr.mxu0 0.0
        %1023 = vmatpush1.msra.mxu0 0.0
        %1024 = vmatprep.subr.mxu0 0.0
        %1025 = vmatpush1.msra.mxu0 0.0
        %1026 = vmatprep.subr.mxu0 0.0
        %1027 = vmatpush1.msra.mxu0 0.0
        %1028 = vmatprep.subr.mxu0 0.0
        %1029 = vmatpush1.msra.mxu0 0.0
        %1030 = vmatprep.subr.mxu0 0.0
        %1031 = vmatpush1.msra.mxu0 0.0
        %1032 = vmatprep.subr.mxu0 0.0
        %1033 = vmatpush1.msra.mxu0 0.0
        %1034 = vmatprep.subr.mxu0 0.0
        %1035 = vmatpush1.msra.mxu0 0.0
        %1036 = vmatprep.subr.mxu0 0.0
        %1037 = vmatpush1.msra.mxu0 0.0
        %1038 = vmatprep.subr.mxu0 0.0
        %1039 = vmatpush1.msra.mxu0 0.0
        %1040 = vmatprep.subr.mxu0 0.0
        %1041 = vmatpush1.msra.mxu0 0.0
        %1042 = vmatprep.subr.mxu0 0.0
        %1043 = vmatpush1.msra.mxu0 0.0
        %1044 = vmatprep.mubr.f32.mxu0 0.0
        %1045 = vmatmul.mubr.f32.gmra.mrb[0].mxu0 %v978
        %v1046 = vpop.f32.mrb[0].mxu0
        %v1047 = vadd.f32 0.0, %v1046
        %v1048 = vpop.f32.mrb[0].mxu0
        %1049 = vdwg.mxu0
        %v1050 = vsel %vm505, %v1047, 0.0
        %1052 = vrot.lane.b32.xlu0 %v1050, 24
        %v1053 = vpop.permute.xlu0 %1052
        %vm1055 = vcmask 261312
        %1056 = vst.msk [vmem:[%s314] sm:$0xff] %vm1055, %v1053
        %s1057 = sand.u32 %s137, 1
        %s1058 = scalar_lea.sflag [#allocation7], %s1057
        %s1059 = sand.u32 %s137, 1
        %s1060 = smul.addr %s1059, 8
        %s1061 = scalar_lea.vmem [#allocation11], %s1060
        %s1062 = sand.u32 %s165, 1
        %s1063 = sand.u32 %s165, 1
        %s1064 = smul.addr %s1063, 32
        %s1065 = scalar_lea.vmem [#allocation12], %s1064
        // Predicated region
        $region45: #{tpu_custom_call.1} parent=31 // pred_check
          %p1066 = pneg %p147
        $region46: #{tpu_custom_call.1} parent=31 // pred_check_branch
          %1068 = sbr.rel (%p1066) target = $region48
        $region47: #{tpu_custom_call.1} parent=31 // pred_region
          %s1070 = ssub.s32 128, 128
          %1071 = vsyncadd %s1058, %s1070
          %s1072 = smul.addr %s39, 2
          %s1073 = sadd.s32 %s40, %s1072
          %s1074 = smul.addr %s1073, 128
          %s1075 = scalar_lea.hbm %s5, %s1074
          %s1077 = sshll.u32 %s1061, 4
          %s1078 = int_to_ptr.vmem [resolvable:$true] %s1077
          %1080 = dma.vmem_to_hbm [thread:$0]  %s1078, 128, %s1075, %s1058
        $region48: #{tpu_custom_call.1} parent=31 // pred_fallthru
          _
        // Predicated region
        $region49: #{tpu_custom_call.1} parent=31 // pred_check
          %p1081 = pneg %p175
        $region50: #{tpu_custom_call.1} parent=31 // pred_check_branch
          %1083 = sbr.rel (%p1081) target = $region52
        $region51: #{tpu_custom_call.1} parent=31 // pred_region
          %s1084 = smul.addr %s39, 8
          %s1085 = sadd.s32 %s40, %s1084
          %s1086 = smul.addr %s1085, 8
          %s1087 = scalar_lea.vmem %s6, %s1086
          // Predicated region
          $region53: #{tpu_custom_call.1} parent=51 // pred_check
            _
          $region54: #{tpu_custom_call.1} parent=51 // pred_check_branch
            %1089 = sbr.rel (0) target = $region56
          $region55: #{tpu_custom_call.1} parent=51 // pred_region
            // Predicated region
            $region57: #{tpu_custom_call.1} parent=55 // pred_check
              _
            $region58: #{tpu_custom_call.1} parent=55 // pred_check_branch
              %1091 = sbr.rel (0) target = $region60
            $region59: #{tpu_custom_call.1} parent=55 // pred_region
              // Predicated region
              $region72: #{tpu_custom_call.1} parent=59 // pred_check
                _
              $region73: #{tpu_custom_call.1} parent=59 // pred_check_branch
                %1112 = sbr.rel (0) target = $region75
              $region74: #{tpu_custom_call.1} parent=59 // pred_region
                loop: start=0, step=1, limit=1
                $region76: #{tpu_custom_call.1} parent=74 // loop_pre_header
                  _
                $region77: #{tpu_custom_call.1} parent=74 // loop_header
                  %s1114 = sphi 0, %s1118
                  %p1115 = scmp.ge.s32.totalorder %s1114, 1
                  %s1119 = sphi %s1065, %s1065
                  %s1120 = sphi %s1087, %s1087
                $region78: #{tpu_custom_call.1} parent=74 // loop_header_branch
                  %1117 = sbr.rel (%p1115) target = $region82
                $region79: #{tpu_custom_call.1} parent=74 // loop_body
                  %v1121 = vld [vmem:[%s1119] sm:$0xff]
                  %1122 = vst [vmem:[%s1120] sm:$0xff] %v1121
                  %v1123 = vld [vmem:[%s1119 + $0x8] sm:$0xff]
                  %1124 = vst [vmem:[%s1120 + $0x10] sm:$0xff] %v1123
                  %v1125 = vld [vmem:[%s1119 + $0x10] sm:$0xff]
                  %1126 = vst [vmem:[%s1120 + $0x20] sm:$0xff] %v1125
                  %v1127 = vld [vmem:[%s1119 + $0x18] sm:$0xff]
                  %1128 = vst [vmem:[%s1120 + $0x30] sm:$0xff] %v1127
                $region80: #{tpu_custom_call.1} parent=74 // loop_footer
                  %s1118 = sadd.s32 1, %s1114
                $region81: #{tpu_custom_call.1} parent=74 // loop_footer_branch
                  %1113 = sbr.rel target = $region77
                $region82: #{tpu_custom_call.1} parent=74 // loop_exit
                  _
              $region75: #{tpu_custom_call.1} parent=59 // pred_fallthru
                _
              // Predicated region
              $region83: #{tpu_custom_call.1} parent=59 // pred_check
                _
              $region84: #{tpu_custom_call.1} parent=59 // pred_check_branch
                %1130 = sbr.rel target = $region86
              $region85: #{tpu_custom_call.1} parent=59 // pred_region
                _
              $region86: #{tpu_custom_call.1} parent=59 // pred_fallthru
                _
            $region60: #{tpu_custom_call.1} parent=55 // pred_fallthru
              _
            // Predicated region
            $region61: #{tpu_custom_call.1} parent=55 // pred_check
              _
            $region62: #{tpu_custom_call.1} parent=55 // pred_check_branch
              %1093 = sbr.rel target = $region64
            $region63: #{tpu_custom_call.1} parent=55 // pred_region
              loop: start=0, step=1, limit=1
              $region65: #{tpu_custom_call.1} parent=63 // loop_pre_header
                _
              $region66: #{tpu_custom_call.1} parent=63 // loop_header
                %s1096 = sphi 0, %s1100
                %p1097 = scmp.ge.s32.totalorder %s1096, 1
                %s1101 = sphi %s1065, %s1065
                %s1102 = sphi %s1087, %s1087
              $region67: #{tpu_custom_call.1} parent=63 // loop_header_branch
                %1099 = sbr.rel (%p1097) target = $region71
              $region68: #{tpu_custom_call.1} parent=63 // loop_body
                %v1103 = vld [vmem:[%s1101] sm:$0xff]
                %1104 = vst [vmem:[%s1102] sm:$0xff] %v1103
                %v1105 = vld [vmem:[%s1101 + $0x8] sm:$0xff]
                %1106 = vst [vmem:[%s1102 + $0x10] sm:$0xff] %v1105
                %v1107 = vld [vmem:[%s1101 + $0x10] sm:$0xff]
                %1108 = vst [vmem:[%s1102 + $0x20] sm:$0xff] %v1107
                %v1109 = vld [vmem:[%s1101 + $0x18] sm:$0xff]
                %1110 = vst [vmem:[%s1102 + $0x30] sm:$0xff] %v1109
              $region69: #{tpu_custom_call.1} parent=63 // loop_footer
                %s1100 = sadd.s32 1, %s1096
              $region70: #{tpu_custom_call.1} parent=63 // loop_footer_branch
                %1095 = sbr.rel target = $region66
              $region71: #{tpu_custom_call.1} parent=63 // loop_exit
                _
            $region64: #{tpu_custom_call.1} parent=55 // pred_fallthru
              _
          $region56: #{tpu_custom_call.1} parent=51 // pred_fallthru
            _
          %1131 = vnop
        $region52: #{tpu_custom_call.1} parent=31 // pred_fallthru
          _
      $region32: #{tpu_custom_call.1} parent=5 // pred_fallthru
        _
      %p1132 = scmp.le.s32.totalorder 2, %s30
      // Predicated region
      $region87: #{tpu_custom_call.1} parent=5 // pred_check
        %p1133 = pneg %p1132
      $region88: #{tpu_custom_call.1} parent=5 // pred_check_branch
        %1135 = sbr.rel (%p1133) target = $region90
      $region89: #{tpu_custom_call.1} parent=5 // pred_region
        %s1136 = ssub.s32 %s30, 2
        // Predicated region
        $region91: #{tpu_custom_call.1} parent=89 // pred_check
          %p1137 = pneg %p153
        $region92: #{tpu_custom_call.1} parent=89 // pred_check_branch
          %1139 = sbr.rel (%p1137) target = $region94
        $region93: #{tpu_custom_call.1} parent=89 // pred_region
          %s1140 = sand.u32 %s138, 1
          %s1141 = scalar_lea.sflag [#allocation7], %s1140
          %s1142 = sand.u32 %s138, 1
          %s1143 = smul.addr %s1142, 8
          %s1144 = scalar_lea.vmem [#allocation11], %s1143
          %1145 = dma.done %s1141, 128
        $region94: #{tpu_custom_call.1} parent=89 // pred_fallthru
          _
        // Predicated region
        $region95: #{tpu_custom_call.1} parent=89 // pred_check
          %p1146 = pneg %p181
        $region96: #{tpu_custom_call.1} parent=89 // pred_check_branch
          %1148 = sbr.rel (%p1146) target = $region98
        $region97: #{tpu_custom_call.1} parent=89 // pred_region
          %s1149 = sand.u32 %s166, 1
          %s1150 = sand.u32 %s166, 1
          %s1151 = smul.addr %s1150, 32
          %s1152 = scalar_lea.vmem [#allocation12], %s1151
        $region98: #{tpu_custom_call.1} parent=89 // pred_fallthru
          _
      $region90: #{tpu_custom_call.1} parent=5 // pred_fallthru
        _
    $region6: #{tpu_custom_call.1} parent=1 // loop_footer
      %s34 = sadd.s32 1, %s30
    $region7: #{tpu_custom_call.1} parent=1 // loop_footer_branch
      %29 = sbr.rel target = $region3
    $region8: #{tpu_custom_call.1} parent=1 // loop_exit
      _
    %1153 = vsyncpa [#allocation6], 1
    %s1154 = scalar_lea.sflag [#allocation6], 1
    %1155 = vsyncpa %s1154, 1
    %1156 = vsyncpa [#allocation9], 1
    %s1157 = scalar_lea.sflag [#allocation9], 1
    %1158 = vsyncpa %s1157, 1
    %1159 = vsyncpa [#allocation7], 1
    %s1160 = scalar_lea.sflag [#allocation7], 1
    %1161 = vsyncpa %s1160, 1

</llo_original>
